<compile_context>
chip_gen: v5e
topology: v5e:2x2
jax: 0.10.0
libtpu: 0.0.40
codegen_flags: <defaults>
</compile_context>

<pallas_src>
import jax
import jax.numpy as jnp
import numpy as np
from jax.experimental import pallas as pl
from jax.experimental.pallas import tpu as pltpu


def _make_kernel(NB, H, W, Cin, P, dilation):
    d = dilation
    R = NB * H * W

    def kernel(x_ref,
               w1_ref, b1_ref, a1_ref,
               wdw2_ref, w2_ref, b2_ref, a2_ref,
               w3_ref, b3_ref, a3_ref,
               out_ref, wpad_ref):
        # ---- stage 1: folded pointwise 1x1 (bf16 MXU) + bn1 shift + PReLU1 ----
        # Input block is already bf16 -> feed the MXU directly, accumulate f32.
        # NOTE: keep W (or TH*W under row tiling) a multiple of 8 so this
        # reshape is relayout-free.
        x2 = x_ref[...].reshape(R, Cin)                     # bf16 (R, Cin)
        t = jnp.dot(x2, w1_ref[...],
                    preferred_element_type=jnp.float32)     # (R, P) f32
        t = t + b1_ref[0]
        t = jnp.where(t > 0, t, a1_ref[0] * t)

        # ---- stage 2: fixed_padding + depthwise 3x3 (stride=1, dilation=d) ----
        # Stage one (H+2d, W+2d)-padded f32 copy; zero only the four thin halo
        # strips (done every step so correctness never depends on scratch
        # persistence under megacore grid splitting), then read the 9 taps as
        # pure shifted views -- no concatenates, no extra full-tile passes.
        zrow = jnp.zeros((NB, d, W + 2 * d, P), jnp.float32)
        zcol = jnp.zeros((NB, H, d, P), jnp.float32)
        wpad_ref[:, :d, :, :] = zrow
        wpad_ref[:, H + d:, :, :] = zrow
        wpad_ref[:, d:H + d, :d, :] = zcol
        wpad_ref[:, d:H + d, W + d:, :] = zcol
        wpad_ref[:, d:H + d, d:W + d, :] = t.reshape(NB, H, W, P)

        w2dw = wdw2_ref[...]                                # (3, 3, P) f32
        acc = jnp.zeros((NB, H, W, P), jnp.float32)
        for kh in range(3):
            for kw in range(3):
                v = wpad_ref[:, kh * d:kh * d + H, kw * d:kw * d + W, :]
                acc = acc + v * w2dw[kh, kw]

        # folded pointwise 1x1 (bf16 MXU) + bn2 shift + PReLU2
        t = jnp.dot(acc.reshape(R, P).astype(jnp.bfloat16), w2_ref[...],
                    preferred_element_type=jnp.float32)     # (R, P)
        t = t + b2_ref[0]
        t = jnp.where(t > 0, t, a2_ref[0] * t)

        # ---- stage 3: folded pointwise 1x1 (bf16 MXU) + bn3 shift ----
        t = jnp.dot(t.astype(jnp.bfloat16), w3_ref[...],
                    preferred_element_type=jnp.float32)     # (R, 4P)
        t = t + b3_ref[0]

        # ---- residual add (downsample is None, Cin == 4P) + PReLU3 ----
        # Re-read the resident input block here (keeps the residual's live
        # range short instead of holding it across all three matmuls).
        t = t + x_ref[...].reshape(R, Cin).astype(jnp.float32)
        t = jnp.where(t > 0, t, a3_ref[0] * t)

        out_ref[...] = t.reshape(NB, H, W, Cin).astype(out_ref.dtype)

    return kernel


def fold_params(p):
    """Fold depthwise-1x1 scales and folded-BN scales into the pointwise mats."""
    # NOTE: bf16 rounding of (dw * pw * bn_scale); if gamma/sqrt(var) has large
    # dynamic range, fall back to a post-matmul f32 per-channel scale instead.
    w1 = (p["wdw1"][0][:, None] * p["wpw1"]) * p["s1"][0][None, :]   # (Cin, P)
    w2 = p["wpw2"] * p["s2"][0][None, :]                             # (P, P)
    w3 = (p["wdw3"][0][:, None] * p["wpw3"]) * p["s3"][0][None, :]   # (P, 4P)
    return dict(
        w1=w1.astype(jnp.bfloat16), b1=p["b1"], a1=p["a1"],
        wdw2=p["wdw2"],                              # stays f32 (VPU taps)
        w2=w2.astype(jnp.bfloat16), b2=p["b2"], a2=p["a2"],
        w3=w3.astype(jnp.bfloat16), b3=p["b3"], a3=p["a3"],
    )


def bottleneck_forward_nhwc(x_nhwc, p, *, dilation=1):
    """NHWC forward (preferred entry point: no layout transposes). Returns bf16."""
    x = x_nhwc.astype(jnp.bfloat16)                  # bf16 HBM I/O
    N, H, W, Cin = x.shape
    P = p["wpw1"].shape[1]
    assert Cin == 4 * P, "downsample=None requires inplanes == 4*planes"
    d = dilation
    assert H > d and W > d, "spatial dims must exceed the dilation"

    fp = fold_params(p)

    # --- batch blocking: NB images per grid step to amortize per-step cost ---
    per_img = (H * W * (8 * Cin + 20 * max(Cin, P))
               + (H + 2 * d) * (W + 2 * d) * P * 4)
    NB = max(1, min(N, (16 << 20) // max(per_img, 1)))
    while N % NB:
        NB -= 1

    full = lambda shape: pl.BlockSpec(shape, lambda n: (0,) * len(shape))

    # --- VMEM budget: double-buffered bf16 x/out blocks + weights + scratch +
    #     headroom for in-kernel value temporaries; cap is generation-aware. ---
    blk_in = NB * H * W * Cin * 2                     # bf16 block
    wbytes = int(sum(int(v.size) * v.dtype.itemsize for v in fp.values()))
    scratch_bytes = NB * (H + 2 * d) * (W + 2 * d) * P * 4
    temps = 10 * NB * H * W * max(Cin, P) * 4
    need = 4 * blk_in + 2 * wbytes + scratch_bytes + temps + (4 << 20)
    try:
        vmem_cap = int(pltpu.get_tpu_info().vmem_capacity_bytes)
    except Exception:
        vmem_cap = 128 << 20
    vmem_limit = int(min(max(need, 32 << 20), int(vmem_cap * 0.85)))

    flops = 2 * N * H * W * (Cin * P + P * P + P * 4 * P + 9 * P)
    cost = pl.CostEstimate(flops=int(flops), transcendentals=0,
                           bytes_accessed=int(2 * N * H * W * Cin * 2 + wbytes))

    kernel = _make_kernel(NB, H, W, Cin, P, d)
    out = pl.pallas_call(
        kernel,
        out_shape=jax.ShapeDtypeStruct((N, H, W, Cin), jnp.bfloat16),
        grid_spec=pltpu.PrefetchScalarGridSpec(
            num_scalar_prefetch=0,
            grid=(N // NB,),
            in_specs=[
                pl.BlockSpec((NB, H, W, Cin), lambda n: (n, 0, 0, 0)),  # x bf16
                full((Cin, P)),          # w1 = dw1 * pw1 * bn1-scale (bf16)
                full((1, P)),            # b1 (bn1 shift)
                full((1, P)),            # a1 (PReLU1)
                full((3, 3, P)),         # wdw2 depthwise 3x3 taps (f32)
                full((P, P)),            # w2 = pw2 * bn2-scale (bf16)
                full((1, P)),            # b2
                full((1, P)),            # a2
                full((P, 4 * P)),        # w3 = dw3 * pw3 * bn3-scale (bf16)
                full((1, 4 * P)),        # b3
                full((1, 4 * P)),        # a3
            ],
            out_specs=pl.BlockSpec((NB, H, W, Cin), lambda n: (n, 0, 0, 0)),
            scratch_shapes=[
                pltpu.VMEM((NB, H + 2 * d, W + 2 * d, P), jnp.float32)],
        ),
        compiler_params=pltpu.CompilerParams(
            dimension_semantics=("parallel",),
            vmem_limit_bytes=vmem_limit),
        cost_estimate=cost,
    )(x,
      fp["w1"], fp["b1"], fp["a1"],
      fp["wdw2"], fp["w2"], fp["b2"], fp["a2"],
      fp["w3"], fp["b3"], fp["a3"])
    return out


def bottleneck_forward(x_nchw, p, *, dilation=1):
    """NCHW wrapper matching the PyTorch interface (layout change only)."""
    x = jnp.transpose(x_nchw, (0, 2, 3, 1))            # NCHW -> NHWC
    out = bottleneck_forward_nhwc(x, p, dilation=dilation)
    return jnp.transpose(out, (0, 3, 1, 2))            # NHWC -> NCHW


def ref_forward_nhwc(x, p, *, dilation=1):
    """Pure-JAX f32 reference (NHWC) mirroring the PyTorch forward (inference BN)."""
    d = dilation
    H, W = x.shape[1], x.shape[2]
    prelu = lambda t, a: jnp.where(t > 0, t, a * t)

    t = x * p["wdw1"][0]
    t = jnp.einsum("nhwc,cp->nhwp", t, p["wpw1"])
    t = prelu(t * p["s1"][0] + p["b1"][0], p["a1"][0])

    tp = jnp.pad(t, ((0, 0), (d, d), (d, d), (0, 0)))
    acc = jnp.zeros_like(t)
    for kh in range(3):
        for kw in range(3):
            acc = acc + tp[:, kh * d:kh * d + H, kw * d:kw * d + W, :] * p["wdw2"][kh, kw]
    t = jnp.einsum("nhwc,cp->nhwp", acc, p["wpw2"])
    t = prelu(t * p["s2"][0] + p["b2"][0], p["a2"][0])

    t = t * p["wdw3"][0]
    t = jnp.einsum("nhwc,cp->nhwp", t, p["wpw3"])
    t = t * p["s3"][0] + p["b3"][0]
    t = t + x
    return prelu(t, p["a3"][0])


def make_params(key, inplanes, planes):
    """Deterministic synthetic parameters matching the PyTorch module shapes."""
    eps = 1e-5
    ks = jax.random.split(key, 20)

    def bn_fold(kg, kb, km, kv, c):
        gamma = 1.0 + 0.1 * jax.random.normal(kg, (c,), jnp.float32)
        beta = 0.1 * jax.random.normal(kb, (c,), jnp.float32)
        mean = 0.1 * jax.random.normal(km, (c,), jnp.float32)
        var = jax.random.uniform(kv, (c,), jnp.float32, 0.5, 1.5)
        scale = gamma / jnp.sqrt(var + eps)
        shift = beta - mean * scale
        return scale.reshape(1, c), shift.reshape(1, c)

    P, Cin = planes, inplanes
    s1, b1 = bn_fold(ks[0], ks[1], ks[2], ks[3], P)
    s2, b2 = bn_fold(ks[4], ks[5], ks[6], ks[7], P)
    s3, b3 = bn_fold(ks[8], ks[9], ks[10], ks[11], 4 * P)

    return dict(
        # conv1: depthwise 1x1 (Cin,) + pointwise (Cin -> P)
        wdw1=(0.2 * jax.random.normal(ks[12], (1, Cin), jnp.float32)),
        wpw1=(0.2 * jax.random.normal(ks[13], (Cin, P), jnp.float32)),
        s1=s1, b1=b1, a1=jnp.full((1, P), 0.25, jnp.float32),
        # conv2: depthwise 3x3 (3,3,P) + pointwise (P -> P)
        wdw2=(0.2 * jax.random.normal(ks[14], (3, 3, P), jnp.float32)),
        wpw2=(0.2 * jax.random.normal(ks[15], (P, P), jnp.float32)),
        s2=s2, b2=b2, a2=jnp.full((1, P), 0.25, jnp.float32),
        # conv3: depthwise 1x1 (P,) + pointwise (P -> 4P)
        wdw3=(0.2 * jax.random.normal(ks[16], (1, P), jnp.float32)),
        wpw3=(0.2 * jax.random.normal(ks[17], (P, 4 * P), jnp.float32)),
        s3=s3, b3=b3, a3=jnp.full((1, 4 * P), 0.25, jnp.float32),
    )


if __name__ == "__main__":
    # Small config: planes=8 -> expansion channels 32; inplanes must equal 32
    # (downsample=None), stride=1, dilation=1.
    N, planes, H, W = 2, 8, 8, 8
    inplanes = planes * 4
    dilation = 1

    key = jax.random.PRNGKey(0)
    kx, kp = jax.random.split(key)
    x_nchw = jax.random.normal(kx, (N, inplanes, H, W), jnp.float32)
    params = make_params(kp, inplanes, planes)

    out = bottleneck_forward(x_nchw, params, dilation=dilation)
    out = jax.block_until_ready(out)

    # Validate against a pure-JAX f32 reference of the same math.  The kernel
    # ingests/emits bf16 and runs bf16 matmuls, so the reference is computed
    # from the same bf16-rounded input and compared with a loosened tolerance.
    x_bf = x_nchw.astype(jnp.bfloat16).astype(jnp.float32)
    x_nhwc = jnp.transpose(x_bf, (0, 2, 3, 1))
    ref = ref_forward_nhwc(x_nhwc, params, dilation=dilation)
    ref = jnp.transpose(ref, (0, 3, 1, 2))
    np.testing.assert_allclose(np.asarray(out.astype(jnp.float32)),
                               np.asarray(ref), rtol=3e-2, atol=3e-2)

    print("KERNEL_OK")
</pallas_src>

<mosaic_0001>
module attributes {stable_mosaic.version = 11 : i64} {
  func.func @kernel(%arg0: i32, %arg1: memref<2x8x8x32xbf16, #tpu.memory_space<vmem>>, %arg2: memref<32x8xbf16, #tpu.memory_space<vmem>>, %arg3: memref<1x8xf32, #tpu.memory_space<vmem>>, %arg4: memref<1x8xf32, #tpu.memory_space<vmem>>, %arg5: memref<3x3x8xf32, #tpu.memory_space<vmem>>, %arg6: memref<8x8xbf16, #tpu.memory_space<vmem>>, %arg7: memref<1x8xf32, #tpu.memory_space<vmem>>, %arg8: memref<1x8xf32, #tpu.memory_space<vmem>>, %arg9: memref<8x32xbf16, #tpu.memory_space<vmem>>, %arg10: memref<1x32xf32, #tpu.memory_space<vmem>>, %arg11: memref<1x32xf32, #tpu.memory_space<vmem>>, %arg12: memref<2x8x8x32xbf16, #tpu.memory_space<vmem>>, %arg13: memref<2x10x10x8xf32, #tpu.memory_space<vmem>>) attributes {dimension_semantics = [#tpu.dimension_semantics<parallel>], iteration_bounds = array<i64: 1>, scalar_prefetch = 0 : i64, scratch_operands = 1 : i64, tpu.core_type = #tpu.core_type<tc>, window_params = [{transform_indices = @transform_0, window_bounds = array<i64: 2, 8, 8, 32>}, {pipeline_mode = #tpu.pipeline_mode<synchronous>, transform_indices = @transform_1, window_bounds = array<i64: 32, 8>}, {pipeline_mode = #tpu.pipeline_mode<synchronous>, transform_indices = @transform_2, window_bounds = array<i64: 1, 8>}, {pipeline_mode = #tpu.pipeline_mode<synchronous>, transform_indices = @transform_3, window_bounds = array<i64: 1, 8>}, {pipeline_mode = #tpu.pipeline_mode<synchronous>, transform_indices = @transform_4, window_bounds = array<i64: 3, 3, 8>}, {pipeline_mode = #tpu.pipeline_mode<synchronous>, transform_indices = @transform_5, window_bounds = array<i64: 8, 8>}, {pipeline_mode = #tpu.pipeline_mode<synchronous>, transform_indices = @transform_6, window_bounds = array<i64: 1, 8>}, {pipeline_mode = #tpu.pipeline_mode<synchronous>, transform_indices = @transform_7, window_bounds = array<i64: 1, 8>}, {pipeline_mode = #tpu.pipeline_mode<synchronous>, transform_indices = @transform_8, window_bounds = array<i64: 8, 32>}, {pipeline_mode = #tpu.pipeline_mode<synchronous>, transform_indices = @transform_9, window_bounds = array<i64: 1, 32>}, {pipeline_mode = #tpu.pipeline_mode<synchronous>, transform_indices = @transform_10, window_bounds = array<i64: 1, 32>}, {transform_indices = @transform_11, window_bounds = array<i64: 2, 8, 8, 32>}]} {
    %c0 = arith.constant 0 : index
    %c0_0 = arith.constant 0 : index
    %c0_1 = arith.constant 0 : index
    %c0_2 = arith.constant 0 : index
    %0 = vector.load %arg1[%c0, %c0_0, %c0_1, %c0_2] : memref<2x8x8x32xbf16, #tpu.memory_space<vmem>>, vector<2x8x8x32xbf16>
    %1 = vector.shape_cast %0 : vector<2x8x8x32xbf16> to vector<128x32xbf16>
    %c0_3 = arith.constant 0 : index
    %c0_4 = arith.constant 0 : index
    %2 = vector.load %arg2[%c0_3, %c0_4] : memref<32x8xbf16, #tpu.memory_space<vmem>>, vector<32x8xbf16>
    %cst = arith.constant dense<0.000000e+00> : vector<128x8xf32>
    %3 = tpu.matmul %1, %2, %cst {dimension_numbers = #tpu.dot_dimension_numbers<[1], [0], [0], [1], [0, 0, 1, 1], [], []>} : vector<128x32xbf16>, vector<32x8xbf16>, vector<128x8xf32> -> vector<128x8xf32>
    %c0_5 = arith.constant 0 : index
    %c0_6 = arith.constant 0 : index
    %4 = vector.load %arg3[%c0_5, %c0_6] : memref<1x8xf32, #tpu.memory_space<vmem>>, vector<1x8xf32>
    %5 = vector.shape_cast %4 : vector<1x8xf32> to vector<8xf32>
    %6 = vector.shape_cast %5 : vector<8xf32> to vector<1x8xf32>
    %7 = vector.broadcast %6 : vector<1x8xf32> to vector<128x8xf32>
    %8 = arith.addf %3, %7 : vector<128x8xf32>
    %cst_7 = arith.constant 0.000000e+00 : f32
    %9 = vector.broadcast %cst_7 : f32 to vector<128x8xf32>
    %10 = arith.cmpf ogt, %8, %9 : vector<128x8xf32>
    %c0_8 = arith.constant 0 : index
    %c0_9 = arith.constant 0 : index
    %11 = vector.load %arg4[%c0_8, %c0_9] : memref<1x8xf32, #tpu.memory_space<vmem>>, vector<1x8xf32>
    %12 = vector.shape_cast %11 : vector<1x8xf32> to vector<8xf32>
    %13 = vector.shape_cast %12 : vector<8xf32> to vector<1x8xf32>
    %14 = vector.broadcast %13 : vector<1x8xf32> to vector<128x8xf32>
    %15 = arith.mulf %14, %8 : vector<128x8xf32>
    %16 = arith.select %10, %8, %15 : vector<128x8xi1>, vector<128x8xf32>
    %cst_10 = arith.constant 0.000000e+00 : f32
    %17 = vector.broadcast %cst_10 : f32 to vector<2x1x10x8xf32>
    %cst_11 = arith.constant 0.000000e+00 : f32
    %18 = vector.broadcast %cst_11 : f32 to vector<2x8x1x8xf32>
    %c0_12 = arith.constant 0 : index
    %c0_13 = arith.constant 0 : index
    %c0_14 = arith.constant 0 : index
    %c0_15 = arith.constant 0 : index
    %19 = vector.load %arg13[%c0_12, %c0_13, %c0_14, %c0_15] : memref<2x10x10x8xf32, #tpu.memory_space<vmem>>, vector<2x1x10x8xf32>
    tpu.vector_store %arg13[%c0_12, %c0_13, %c0_14, %c0_15], %17 {strides = array<i32>} : memref<2x10x10x8xf32, #tpu.memory_space<vmem>>, vector<2x1x10x8xf32>,
    %c0_16 = arith.constant 0 : index
    %c9 = arith.constant 9 : index
    %c0_17 = arith.constant 0 : index
    %c0_18 = arith.constant 0 : index
    %20 = vector.load %arg13[%c0_16, %c9, %c0_17, %c0_18] : memref<2x10x10x8xf32, #tpu.memory_space<vmem>>, vector<2x1x10x8xf32>
    tpu.vector_store %arg13[%c0_16, %c9, %c0_17, %c0_18], %17 {strides = array<i32>} : memref<2x10x10x8xf32, #tpu.memory_space<vmem>>, vector<2x1x10x8xf32>,
    %c0_19 = arith.constant 0 : index
    %c1 = arith.constant 1 : index
    %c0_20 = arith.constant 0 : index
    %c0_21 = arith.constant 0 : index
    %21 = vector.load %arg13[%c0_19, %c1, %c0_20, %c0_21] : memref<2x10x10x8xf32, #tpu.memory_space<vmem>>, vector<2x8x1x8xf32>
    tpu.vector_store %arg13[%c0_19, %c1, %c0_20, %c0_21], %18 {strides = array<i32>} : memref<2x10x10x8xf32, #tpu.memory_space<vmem>>, vector<2x8x1x8xf32>,
    %c0_22 = arith.constant 0 : index
    %c1_23 = arith.constant 1 : index
    %c9_24 = arith.constant 9 : index
    %c0_25 = arith.constant 0 : index
    %22 = vector.load %arg13[%c0_22, %c1_23, %c9_24, %c0_25] : memref<2x10x10x8xf32, #tpu.memory_space<vmem>>, vector<2x8x1x8xf32>
    tpu.vector_store %arg13[%c0_22, %c1_23, %c9_24, %c0_25], %18 {strides = array<i32>} : memref<2x10x10x8xf32, #tpu.memory_space<vmem>>, vector<2x8x1x8xf32>,
    %23 = vector.shape_cast %16 : vector<128x8xf32> to vector<2x8x8x8xf32>
    %c0_26 = arith.constant 0 : index
    %c1_27 = arith.constant 1 : index
    %c1_28 = arith.constant 1 : index
    %c0_29 = arith.constant 0 : index
    %24 = vector.load %arg13[%c0_26, %c1_27, %c1_28, %c0_29] : memref<2x10x10x8xf32, #tpu.memory_space<vmem>>, vector<2x8x8x8xf32>
    tpu.vector_store %arg13[%c0_26, %c1_27, %c1_28, %c0_29], %23 {strides = array<i32>} : memref<2x10x10x8xf32, #tpu.memory_space<vmem>>, vector<2x8x8x8xf32>,
    %c0_30 = arith.constant 0 : index
    %c0_31 = arith.constant 0 : index
    %c0_32 = arith.constant 0 : index
    %25 = vector.load %arg5[%c0_30, %c0_31, %c0_32] : memref<3x3x8xf32, #tpu.memory_space<vmem>>, vector<3x3x8xf32>
    %cst_33 = arith.constant 0.000000e+00 : f32
    %26 = vector.broadcast %cst_33 : f32 to vector<2x8x8x8xf32>
    %c0_34 = arith.constant 0 : index
    %c0_35 = arith.constant 0 : index
    %c0_36 = arith.constant 0 : index
    %c0_37 = arith.constant 0 : index
    %27 = vector.load %arg13[%c0_34, %c0_35, %c0_36, %c0_37] : memref<2x10x10x8xf32, #tpu.memory_space<vmem>>, vector<2x8x8x8xf32>
    %28 = vector.extract_strided_slice %25 {offsets = [0, 0, 0], sizes = [1, 1, 8], strides = [1, 1, 1]} : vector<3x3x8xf32> to vector<1x1x8xf32>
    %29 = vector.shape_cast %28 : vector<1x1x8xf32> to vector<8xf32>
    %30 = vector.shape_cast %29 : vector<8xf32> to vector<1x1x1x8xf32>
    %31 = vector.broadcast %30 : vector<1x1x1x8xf32> to vector<2x8x8x8xf32>
    %32 = arith.mulf %27, %31 : vector<2x8x8x8xf32>
    %33 = arith.addf %26, %32 : vector<2x8x8x8xf32>
    %c0_38 = arith.constant 0 : index
    %c0_39 = arith.constant 0 : index
    %c1_40 = arith.constant 1 : index
    %c0_41 = arith.constant 0 : index
    %34 = vector.load %arg13[%c0_38, %c0_39, %c1_40, %c0_41] : memref<2x10x10x8xf32, #tpu.memory_space<vmem>>, vector<2x8x8x8xf32>
    %35 = vector.extract_strided_slice %25 {offsets = [0, 1, 0], sizes = [1, 1, 8], strides = [1, 1, 1]} : vector<3x3x8xf32> to vector<1x1x8xf32>
    %36 = vector.shape_cast %35 : vector<1x1x8xf32> to vector<8xf32>
    %37 = vector.shape_cast %36 : vector<8xf32> to vector<1x1x1x8xf32>
    %38 = vector.broadcast %37 : vector<1x1x1x8xf32> to vector<2x8x8x8xf32>
    %39 = arith.mulf %34, %38 : vector<2x8x8x8xf32>
    %40 = arith.addf %33, %39 : vector<2x8x8x8xf32>
    %c0_42 = arith.constant 0 : index
    %c0_43 = arith.constant 0 : index
    %c2 = arith.constant 2 : index
    %c0_44 = arith.constant 0 : index
    %41 = vector.load %arg13[%c0_42, %c0_43, %c2, %c0_44] : memref<2x10x10x8xf32, #tpu.memory_space<vmem>>, vector<2x8x8x8xf32>
    %42 = vector.extract_strided_slice %25 {offsets = [0, 2, 0], sizes = [1, 1, 8], strides = [1, 1, 1]} : vector<3x3x8xf32> to vector<1x1x8xf32>
    %43 = vector.shape_cast %42 : vector<1x1x8xf32> to vector<8xf32>
    %44 = vector.shape_cast %43 : vector<8xf32> to vector<1x1x1x8xf32>
    %45 = vector.broadcast %44 : vector<1x1x1x8xf32> to vector<2x8x8x8xf32>
    %46 = arith.mulf %41, %45 : vector<2x8x8x8xf32>
    %47 = arith.addf %40, %46 : vector<2x8x8x8xf32>
    %c0_45 = arith.constant 0 : index
    %c1_46 = arith.constant 1 : index
    %c0_47 = arith.constant 0 : index
    %c0_48 = arith.constant 0 : index
    %48 = vector.load %arg13[%c0_45, %c1_46, %c0_47, %c0_48] : memref<2x10x10x8xf32, #tpu.memory_space<vmem>>, vector<2x8x8x8xf32>
    %49 = vector.extract_strided_slice %25 {offsets = [1, 0, 0], sizes = [1, 1, 8], strides = [1, 1, 1]} : vector<3x3x8xf32> to vector<1x1x8xf32>
    %50 = vector.shape_cast %49 : vector<1x1x8xf32> to vector<8xf32>
    %51 = vector.shape_cast %50 : vector<8xf32> to vector<1x1x1x8xf32>
    %52 = vector.broadcast %51 : vector<1x1x1x8xf32> to vector<2x8x8x8xf32>
    %53 = arith.mulf %48, %52 : vector<2x8x8x8xf32>
    %54 = arith.addf %47, %53 : vector<2x8x8x8xf32>
    %c0_49 = arith.constant 0 : index
    %c1_50 = arith.constant 1 : index
    %c1_51 = arith.constant 1 : index
    %c0_52 = arith.constant 0 : index
    %55 = vector.load %arg13[%c0_49, %c1_50, %c1_51, %c0_52] : memref<2x10x10x8xf32, #tpu.memory_space<vmem>>, vector<2x8x8x8xf32>
    %56 = vector.extract_strided_slice %25 {offsets = [1, 1, 0], sizes = [1, 1, 8], strides = [1, 1, 1]} : vector<3x3x8xf32> to vector<1x1x8xf32>
    %57 = vector.shape_cast %56 : vector<1x1x8xf32> to vector<8xf32>
    %58 = vector.shape_cast %57 : vector<8xf32> to vector<1x1x1x8xf32>
    %59 = vector.broadcast %58 : vector<1x1x1x8xf32> to vector<2x8x8x8xf32>
    %60 = arith.mulf %55, %59 : vector<2x8x8x8xf32>
    %61 = arith.addf %54, %60 : vector<2x8x8x8xf32>
    %c0_53 = arith.constant 0 : index
    %c1_54 = arith.constant 1 : index
    %c2_55 = arith.constant 2 : index
    %c0_56 = arith.constant 0 : index
    %62 = vector.load %arg13[%c0_53, %c1_54, %c2_55, %c0_56] : memref<2x10x10x8xf32, #tpu.memory_space<vmem>>, vector<2x8x8x8xf32>
    %63 = vector.extract_strided_slice %25 {offsets = [1, 2, 0], sizes = [1, 1, 8], strides = [1, 1, 1]} : vector<3x3x8xf32> to vector<1x1x8xf32>
    %64 = vector.shape_cast %63 : vector<1x1x8xf32> to vector<8xf32>
    %65 = vector.shape_cast %64 : vector<8xf32> to vector<1x1x1x8xf32>
    %66 = vector.broadcast %65 : vector<1x1x1x8xf32> to vector<2x8x8x8xf32>
    %67 = arith.mulf %62, %66 : vector<2x8x8x8xf32>
    %68 = arith.addf %61, %67 : vector<2x8x8x8xf32>
    %c0_57 = arith.constant 0 : index
    %c2_58 = arith.constant 2 : index
    %c0_59 = arith.constant 0 : index
    %c0_60 = arith.constant 0 : index
    %69 = vector.load %arg13[%c0_57, %c2_58, %c0_59, %c0_60] : memref<2x10x10x8xf32, #tpu.memory_space<vmem>>, vector<2x8x8x8xf32>
    %70 = vector.extract_strided_slice %25 {offsets = [2, 0, 0], sizes = [1, 1, 8], strides = [1, 1, 1]} : vector<3x3x8xf32> to vector<1x1x8xf32>
    %71 = vector.shape_cast %70 : vector<1x1x8xf32> to vector<8xf32>
    %72 = vector.shape_cast %71 : vector<8xf32> to vector<1x1x1x8xf32>
    %73 = vector.broadcast %72 : vector<1x1x1x8xf32> to vector<2x8x8x8xf32>
    %74 = arith.mulf %69, %73 : vector<2x8x8x8xf32>
    %75 = arith.addf %68, %74 : vector<2x8x8x8xf32>
    %c0_61 = arith.constant 0 : index
    %c2_62 = arith.constant 2 : index
    %c1_63 = arith.constant 1 : index
    %c0_64 = arith.constant 0 : index
    %76 = vector.load %arg13[%c0_61, %c2_62, %c1_63, %c0_64] : memref<2x10x10x8xf32, #tpu.memory_space<vmem>>, vector<2x8x8x8xf32>
    %77 = vector.extract_strided_slice %25 {offsets = [2, 1, 0], sizes = [1, 1, 8], strides = [1, 1, 1]} : vector<3x3x8xf32> to vector<1x1x8xf32>
    %78 = vector.shape_cast %77 : vector<1x1x8xf32> to vector<8xf32>
    %79 = vector.shape_cast %78 : vector<8xf32> to vector<1x1x1x8xf32>
    %80 = vector.broadcast %79 : vector<1x1x1x8xf32> to vector<2x8x8x8xf32>
    %81 = arith.mulf %76, %80 : vector<2x8x8x8xf32>
    %82 = arith.addf %75, %81 : vector<2x8x8x8xf32>
    %c0_65 = arith.constant 0 : index
    %c2_66 = arith.constant 2 : index
    %c2_67 = arith.constant 2 : index
    %c0_68 = arith.constant 0 : index
    %83 = vector.load %arg13[%c0_65, %c2_66, %c2_67, %c0_68] : memref<2x10x10x8xf32, #tpu.memory_space<vmem>>, vector<2x8x8x8xf32>
    %84 = vector.extract_strided_slice %25 {offsets = [2, 2, 0], sizes = [1, 1, 8], strides = [1, 1, 1]} : vector<3x3x8xf32> to vector<1x1x8xf32>
    %85 = vector.shape_cast %84 : vector<1x1x8xf32> to vector<8xf32>
    %86 = vector.shape_cast %85 : vector<8xf32> to vector<1x1x1x8xf32>
    %87 = vector.broadcast %86 : vector<1x1x1x8xf32> to vector<2x8x8x8xf32>
    %88 = arith.mulf %83, %87 : vector<2x8x8x8xf32>
    %89 = arith.addf %82, %88 : vector<2x8x8x8xf32>
    %90 = vector.shape_cast %89 : vector<2x8x8x8xf32> to vector<128x8xf32>
    %91 = arith.truncf %90 : vector<128x8xf32> to vector<128x8xbf16>
    %c0_69 = arith.constant 0 : index
    %c0_70 = arith.constant 0 : index
    %92 = vector.load %arg6[%c0_69, %c0_70] : memref<8x8xbf16, #tpu.memory_space<vmem>>, vector<8x8xbf16>
    %cst_71 = arith.constant dense<0.000000e+00> : vector<128x8xf32>
    %93 = tpu.matmul %91, %92, %cst_71 {dimension_numbers = #tpu.dot_dimension_numbers<[1], [0], [0], [1], [0, 0, 1, 1], [], []>} : vector<128x8xbf16>, vector<8x8xbf16>, vector<128x8xf32> -> vector<128x8xf32>
    %c0_72 = arith.constant 0 : index
    %c0_73 = arith.constant 0 : index
    %94 = vector.load %arg7[%c0_72, %c0_73] : memref<1x8xf32, #tpu.memory_space<vmem>>, vector<1x8xf32>
    %95 = vector.shape_cast %94 : vector<1x8xf32> to vector<8xf32>
    %96 = vector.shape_cast %95 : vector<8xf32> to vector<1x8xf32>
    %97 = vector.broadcast %96 : vector<1x8xf32> to vector<128x8xf32>
    %98 = arith.addf %93, %97 : vector<128x8xf32>
    %cst_74 = arith.constant 0.000000e+00 : f32
    %99 = vector.broadcast %cst_74 : f32 to vector<128x8xf32>
    %100 = arith.cmpf ogt, %98, %99 : vector<128x8xf32>
    %c0_75 = arith.constant 0 : index
    %c0_76 = arith.constant 0 : index
    %101 = vector.load %arg8[%c0_75, %c0_76] : memref<1x8xf32, #tpu.memory_space<vmem>>, vector<1x8xf32>
    %102 = vector.shape_cast %101 : vector<1x8xf32> to vector<8xf32>
    %103 = vector.shape_cast %102 : vector<8xf32> to vector<1x8xf32>
    %104 = vector.broadcast %103 : vector<1x8xf32> to vector<128x8xf32>
    %105 = arith.mulf %104, %98 : vector<128x8xf32>
    %106 = arith.select %100, %98, %105 : vector<128x8xi1>, vector<128x8xf32>
    %107 = arith.truncf %106 : vector<128x8xf32> to vector<128x8xbf16>
    %c0_77 = arith.constant 0 : index
    %c0_78 = arith.constant 0 : index
    %108 = vector.load %arg9[%c0_77, %c0_78] : memref<8x32xbf16, #tpu.memory_space<vmem>>, vector<8x32xbf16>
    %cst_79 = arith.constant dense<0.000000e+00> : vector<128x32xf32>
    %109 = tpu.matmul %107, %108, %cst_79 {dimension_numbers = #tpu.dot_dimension_numbers<[1], [0], [0], [1], [0, 0, 1, 1], [], []>} : vector<128x8xbf16>, vector<8x32xbf16>, vector<128x32xf32> -> vector<128x32xf32>
    %c0_80 = arith.constant 0 : index
    %c0_81 = arith.constant 0 : index
    %110 = vector.load %arg10[%c0_80, %c0_81] : memref<1x32xf32, #tpu.memory_space<vmem>>, vector<1x32xf32>
    %111 = vector.shape_cast %110 : vector<1x32xf32> to vector<32xf32>
    %112 = vector.shape_cast %111 : vector<32xf32> to vector<1x32xf32>
    %113 = vector.broadcast %112 : vector<1x32xf32> to vector<128x32xf32>
    %114 = arith.addf %109, %113 : vector<128x32xf32>
    %c0_82 = arith.constant 0 : index
    %c0_83 = arith.constant 0 : index
    %c0_84 = arith.constant 0 : index
    %c0_85 = arith.constant 0 : index
    %115 = vector.load %arg1[%c0_82, %c0_83, %c0_84, %c0_85] : memref<2x8x8x32xbf16, #tpu.memory_space<vmem>>, vector<2x8x8x32xbf16>
    %116 = vector.shape_cast %115 : vector<2x8x8x32xbf16> to vector<128x32xbf16>
    %117 = arith.extf %116 : vector<128x32xbf16> to vector<128x32xf32>
    %118 = arith.addf %114, %117 : vector<128x32xf32>
    %cst_86 = arith.constant 0.000000e+00 : f32
    %119 = vector.broadcast %cst_86 : f32 to vector<128x32xf32>
    %120 = arith.cmpf ogt, %118, %119 : vector<128x32xf32>
    %c0_87 = arith.constant 0 : index
    %c0_88 = arith.constant 0 : index
    %121 = vector.load %arg11[%c0_87, %c0_88] : memref<1x32xf32, #tpu.memory_space<vmem>>, vector<1x32xf32>
    %122 = vector.shape_cast %121 : vector<1x32xf32> to vector<32xf32>
    %123 = vector.shape_cast %122 : vector<32xf32> to vector<1x32xf32>
    %124 = vector.broadcast %123 : vector<1x32xf32> to vector<128x32xf32>
    %125 = arith.mulf %124, %118 : vector<128x32xf32>
    %126 = arith.select %120, %118, %125 : vector<128x32xi1>, vector<128x32xf32>
    %127 = vector.shape_cast %126 : vector<128x32xf32> to vector<2x8x8x32xf32>
    %128 = arith.truncf %127 : vector<2x8x8x32xf32> to vector<2x8x8x32xbf16>
    %c0_89 = arith.constant 0 : index
    %c0_90 = arith.constant 0 : index
    %c0_91 = arith.constant 0 : index
    %c0_92 = arith.constant 0 : index
    %129 = vector.load %arg12[%c0_89, %c0_90, %c0_91, %c0_92] : memref<2x8x8x32xbf16, #tpu.memory_space<vmem>>, vector<2x8x8x32xbf16>
    tpu.vector_store %arg12[%c0_89, %c0_90, %c0_91, %c0_92], %128 {strides = array<i32>} : memref<2x8x8x32xbf16, #tpu.memory_space<vmem>>, vector<2x8x8x32xbf16>,
    return
  }
  func.func @transform_0(%arg0: i32) -> (i32, i32, i32, i32) {
    %c0_i32 = arith.constant 0 : i32
    %c0_i32_0 = arith.constant 0 : i32
    %c0_i32_1 = arith.constant 0 : i32
    %c0_i32_2 = arith.constant 0 : i32
    return %arg0, %c0_i32, %c0_i32_0, %c0_i32_1 : i32, i32, i32, i32
  }
  func.func @transform_1(%arg0: i32) -> (i32, i32) {
    %c0_i32 = arith.constant 0 : i32
    %c0_i32_0 = arith.constant 0 : i32
    %c0_i32_1 = arith.constant 0 : i32
    return %c0_i32, %c0_i32_0 : i32, i32
  }
  func.func @transform_2(%arg0: i32) -> (i32, i32) {
    %c0_i32 = arith.constant 0 : i32
    %c0_i32_0 = arith.constant 0 : i32
    %c0_i32_1 = arith.constant 0 : i32
    return %c0_i32, %c0_i32_0 : i32, i32
  }
  func.func @transform_3(%arg0: i32) -> (i32, i32) {
    %c0_i32 = arith.constant 0 : i32
    %c0_i32_0 = arith.constant 0 : i32
    %c0_i32_1 = arith.constant 0 : i32
    return %c0_i32, %c0_i32_0 : i32, i32
  }
  func.func @transform_4(%arg0: i32) -> (i32, i32, i32) {
    %c0_i32 = arith.constant 0 : i32
    %c0_i32_0 = arith.constant 0 : i32
    %c0_i32_1 = arith.constant 0 : i32
    %c0_i32_2 = arith.constant 0 : i32
    return %c0_i32, %c0_i32_0, %c0_i32_1 : i32, i32, i32
  }
  func.func @transform_5(%arg0: i32) -> (i32, i32) {
    %c0_i32 = arith.constant 0 : i32
    %c0_i32_0 = arith.constant 0 : i32
    %c0_i32_1 = arith.constant 0 : i32
    return %c0_i32, %c0_i32_0 : i32, i32
  }
  func.func @transform_6(%arg0: i32) -> (i32, i32) {
    %c0_i32 = arith.constant 0 : i32
    %c0_i32_0 = arith.constant 0 : i32
    %c0_i32_1 = arith.constant 0 : i32
    return %c0_i32, %c0_i32_0 : i32, i32
  }
  func.func @transform_7(%arg0: i32) -> (i32, i32) {
    %c0_i32 = arith.constant 0 : i32
    %c0_i32_0 = arith.constant 0 : i32
    %c0_i32_1 = arith.constant 0 : i32
    return %c0_i32, %c0_i32_0 : i32, i32
  }
  func.func @transform_8(%arg0: i32) -> (i32, i32) {
    %c0_i32 = arith.constant 0 : i32
    %c0_i32_0 = arith.constant 0 : i32
    %c0_i32_1 = arith.constant 0 : i32
    return %c0_i32, %c0_i32_0 : i32, i32
  }
  func.func @transform_9(%arg0: i32) -> (i32, i32) {
    %c0_i32 = arith.constant 0 : i32
    %c0_i32_0 = arith.constant 0 : i32
    %c0_i32_1 = arith.constant 0 : i32
    return %c0_i32, %c0_i32_0 : i32, i32
  }
  func.func @transform_10(%arg0: i32) -> (i32, i32) {
    %c0_i32 = arith.constant 0 : i32
    %c0_i32_0 = arith.constant 0 : i32
    %c0_i32_1 = arith.constant 0 : i32
    return %c0_i32, %c0_i32_0 : i32, i32
  }
  func.func @transform_11(%arg0: i32) -> (i32, i32, i32, i32) {
    %c0_i32 = arith.constant 0 : i32
    %c0_i32_0 = arith.constant 0 : i32
    %c0_i32_1 = arith.constant 0 : i32
    %c0_i32_2 = arith.constant 0 : i32
    return %arg0, %c0_i32, %c0_i32_0, %c0_i32_1 : i32, i32, i32, i32
  }
}

</mosaic_0001>

<llo_original>
// kernel: tpu_custom_call.1
$region0: #{tpu_custom_call.1}
  #allocation0 [shape = 'u32[]', space=smem, size = 0x4, offset = 0x4, fixed_abs, tag = 'smem constant byte address 0x4 - core index']
  #allocation1 [shape = 'u32[72,128]{1,0:T(1,128)}', space=vmem, size = 0x9000, scoped, tag = 'internal scratch']
  #allocation2 [shape = 'f32[2,10,10,8]{3,2,1,0:T(8,128)}', space=vmem, size = 0x28000, scoped, tag = 'scratch operand']
  %s0 = inlined_call_operand.hbm [shape: bf16[2,8,8,32], index: 0, kind: input, shape index: {}]
  %s1 = inlined_call_operand.vmem [shape: bf16[32,8], index: 1, kind: input, shape index: {}]
  %s2 = inlined_call_operand.vmem [shape: f32[1,8], index: 2, kind: input, shape index: {}]
  %s3 = inlined_call_operand.vmem [shape: f32[1,8], index: 3, kind: input, shape index: {}]
  %s4 = inlined_call_operand.vmem [shape: f32[3,3,8], index: 4, kind: input, shape index: {}]
  %s5 = inlined_call_operand.vmem [shape: bf16[8,8], index: 5, kind: input, shape index: {}]
  %s6 = inlined_call_operand.vmem [shape: f32[1,8], index: 6, kind: input, shape index: {}]
  %s7 = inlined_call_operand.vmem [shape: f32[1,8], index: 7, kind: input, shape index: {}]
  %s8 = inlined_call_operand.vmem [shape: bf16[8,32], index: 8, kind: input, shape index: {}]
  %s9 = inlined_call_operand.vmem [shape: f32[1,32], index: 9, kind: input, shape index: {}]
  %s10 = inlined_call_operand.vmem [shape: f32[1,32], index: 10, kind: input, shape index: {}]
  %s11 = inlined_call_operand.hbm [shape: bf16[2,8,8,32], index: 11, kind: output, shape index: {}]
  %s12 = sld [smem:[#allocation0]]
  $region58: #{tpu_custom_call.1} parent=0
    _
  %s14 = ssub.s32 1, %s12
  %s15 = scalar_select 0, %s14, %s12
  $region1: #{tpu_custom_call.1} parent=0
    #allocation3 [shape = 'u8[32768]{0}', space=vmem, size = 0x8000, scoped, tag = 'input window, operand 0, single buffered']
    #allocation4 [shape = 's32[1]{0}', space=sflag, size = 0x4, scoped, tag = 'scoped memory for tpu_custom_call.1']
    #allocation5 [shape = 's32[1]{0}', space=sflag, size = 0x4, scoped, tag = 'scoped memory for tpu_custom_call.1']
    #allocation6 [shape = 'u8[32768]{0}', space=vmem, size = 0x8000, scoped, tag = 'output window, operand 0, single buffered']
    %16 = vsyncpa [#allocation4], 0
    %17 = vsyncpa [#allocation5], 0
    // Predicated region
    $region2: #{tpu_custom_call.1} parent=1 // pred_check
      _
    $region3: #{tpu_custom_call.1} parent=1 // pred_check_branch
      %19 = sbr.rel (0) target = $region5
    $region4: #{tpu_custom_call.1} parent=1 // pred_region
      %21 = vsyncadd [#allocation4], 0
      %s22 = sshll.u32 %s0, 4
      %s23 = int_to_ptr.hbm [resolvable:$true] %s22
      %s24 = sshll.u32 [#allocation3], 4
      %s25 = int_to_ptr.vmem [resolvable:$true] %s24
      %30 = dma.hbm_to_vmem [thread:$0]  %s23, 1024, %s25, [#allocation4], 64, 64, 4
    $region5: #{tpu_custom_call.1} parent=1 // pred_fallthru
      _
    // Predicated region
    $region6: #{tpu_custom_call.1} parent=1 // pred_check
      _
    $region7: #{tpu_custom_call.1} parent=1 // pred_check_branch
      %32 = sbr.rel (0) target = $region9
    $region8: #{tpu_custom_call.1} parent=1 // pred_region
      _
    $region9: #{tpu_custom_call.1} parent=1 // pred_fallthru
      _
    // Predicated region
    $region10: #{tpu_custom_call.1} parent=1 // pred_check
      _
    $region11: #{tpu_custom_call.1} parent=1 // pred_check_branch
      %34 = sbr.rel (0) target = $region13
    $region12: #{tpu_custom_call.1} parent=1 // pred_region
      _
    $region13: #{tpu_custom_call.1} parent=1 // pred_fallthru
      _
    // Predicated region
    $region14: #{tpu_custom_call.1} parent=1 // pred_check
      _
    $region15: #{tpu_custom_call.1} parent=1 // pred_check_branch
      %36 = sbr.rel (0) target = $region17
    $region16: #{tpu_custom_call.1} parent=1 // pred_region
      _
    $region17: #{tpu_custom_call.1} parent=1 // pred_fallthru
      _
    // Predicated region
    $region18: #{tpu_custom_call.1} parent=1 // pred_check
      _
    $region19: #{tpu_custom_call.1} parent=1 // pred_check_branch
      %38 = sbr.rel (0) target = $region21
    $region20: #{tpu_custom_call.1} parent=1 // pred_region
      _
    $region21: #{tpu_custom_call.1} parent=1 // pred_fallthru
      _
    // Predicated region
    $region22: #{tpu_custom_call.1} parent=1 // pred_check
      _
    $region23: #{tpu_custom_call.1} parent=1 // pred_check_branch
      %40 = sbr.rel (0) target = $region25
    $region24: #{tpu_custom_call.1} parent=1 // pred_region
      _
    $region25: #{tpu_custom_call.1} parent=1 // pred_fallthru
      _
    // Predicated region
    $region26: #{tpu_custom_call.1} parent=1 // pred_check
      _
    $region27: #{tpu_custom_call.1} parent=1 // pred_check_branch
      %42 = sbr.rel (0) target = $region29
    $region28: #{tpu_custom_call.1} parent=1 // pred_region
      _
    $region29: #{tpu_custom_call.1} parent=1 // pred_fallthru
      _
    // Predicated region
    $region30: #{tpu_custom_call.1} parent=1 // pred_check
      _
    $region31: #{tpu_custom_call.1} parent=1 // pred_check_branch
      %44 = sbr.rel (0) target = $region33
    $region32: #{tpu_custom_call.1} parent=1 // pred_region
      _
    $region33: #{tpu_custom_call.1} parent=1 // pred_fallthru
      _
    // Predicated region
    $region34: #{tpu_custom_call.1} parent=1 // pred_check
      _
    $region35: #{tpu_custom_call.1} parent=1 // pred_check_branch
      %46 = sbr.rel (0) target = $region37
    $region36: #{tpu_custom_call.1} parent=1 // pred_region
      _
    $region37: #{tpu_custom_call.1} parent=1 // pred_fallthru
      _
    // Predicated region
    $region38: #{tpu_custom_call.1} parent=1 // pred_check
      _
    $region39: #{tpu_custom_call.1} parent=1 // pred_check_branch
      %48 = sbr.rel (0) target = $region41
    $region40: #{tpu_custom_call.1} parent=1 // pred_region
      _
    $region41: #{tpu_custom_call.1} parent=1 // pred_fallthru
      _
    // Predicated region
    $region42: #{tpu_custom_call.1} parent=1 // pred_check
      _
    $region43: #{tpu_custom_call.1} parent=1 // pred_check_branch
      %50 = sbr.rel (0) target = $region45
    $region44: #{tpu_custom_call.1} parent=1 // pred_region
      _
    $region45: #{tpu_custom_call.1} parent=1 // pred_fallthru
      _
    // Predicated region
    $region46: #{tpu_custom_call.1} parent=1 // pred_check
      _
    $region47: #{tpu_custom_call.1} parent=1 // pred_check_branch
      %52 = sbr.rel (0) target = $region49
    $region48: #{tpu_custom_call.1} parent=1 // pred_region
      %54 = dma.done [#allocation4], 1024
    $region49: #{tpu_custom_call.1} parent=1 // pred_fallthru
      _
    %v56 = vld [vmem:[#allocation3] sm:$0xf]
    %v57 = vld [vmem:[#allocation3 + $0x4] sm:$0xf]
    %v58 = vld [vmem:[#allocation3 + $0x8] sm:$0xf]
    %v59 = vld [vmem:[#allocation3 + $0xc] sm:$0xf]
    %v60 = vld [vmem:[#allocation3 + $0x10] sm:$0xf]
    %v61 = vld [vmem:[#allocation3 + $0x14] sm:$0xf]
    %v62 = vld [vmem:[#allocation3 + $0x18] sm:$0xf]
    %v63 = vld [vmem:[#allocation3 + $0x1c] sm:$0xf]
    %v64 = vld [vmem:[#allocation3 + $0x20] sm:$0xf]
    %v65 = vld [vmem:[#allocation3 + $0x24] sm:$0xf]
    %v66 = vld [vmem:[#allocation3 + $0x28] sm:$0xf]
    %v67 = vld [vmem:[#allocation3 + $0x2c] sm:$0xf]
    %v68 = vld [vmem:[#allocation3 + $0x30] sm:$0xf]
    %v69 = vld [vmem:[#allocation3 + $0x34] sm:$0xf]
    %v70 = vld [vmem:[#allocation3 + $0x38] sm:$0xf]
    %v71 = vld [vmem:[#allocation3 + $0x3c] sm:$0xf]
    %v72 = vld [vmem:[%s1] sm:$0xf]
    %v73 = vld [vmem:[%s1 + $0x4] sm:$0xf]
    %v74 = vld [vmem:[%s1 + $0x8] sm:$0xf]
    %v75 = vld [vmem:[%s1 + $0xc] sm:$0xf]
    %v76 = vld [vmem:[%s2] sm:$0x1]
    %v78 = vperm.slane %v76, 0
    %v96 = vunpack.c.l.b16 %v56
    %v97 = vunpack.c.l.b16 %v57
    %v98 = vunpack.c.l.b16 %v58
    %v99 = vunpack.c.l.b16 %v59
    %v100 = vunpack.c.l.b16 %v60
    %v101 = vunpack.c.l.b16 %v61
    %v102 = vunpack.c.l.b16 %v62
    %v103 = vunpack.c.l.b16 %v63
    %v104 = vunpack.c.l.b16 %v64
    %v105 = vunpack.c.l.b16 %v65
    %v106 = vunpack.c.l.b16 %v66
    %v107 = vunpack.c.l.b16 %v67
    %v108 = vunpack.c.l.b16 %v68
    %v109 = vunpack.c.l.b16 %v69
    %v110 = vunpack.c.l.b16 %v70
    %v111 = vunpack.c.l.b16 %v71
    %v112 = vpack.c.b16 %v97, %v96
    %v113 = vpack.c.b16 %v99, %v98
    %v114 = vpack.c.b16 %v101, %v100
    %v115 = vpack.c.b16 %v103, %v102
    %v116 = vpack.c.b16 %v105, %v104
    %v117 = vpack.c.b16 %v107, %v106
    %v118 = vpack.c.b16 %v109, %v108
    %v119 = vpack.c.b16 %v111, %v110
    %v124 = vunpack.c.l.b16 %v72
    %v125 = vunpack.c.l.b16 %v73
    %v126 = vunpack.c.l.b16 %v74
    %v127 = vunpack.c.l.b16 %v75
    %v128 = vpack.c.b16 %v125, %v124
    %v129 = vpack.c.b16 %v127, %v126
    %vm132 = vcmask 261120
    %v134 = vsel %vm132, %v112, 0
    %v137 = vsel %vm132, %v113, 0
    %v140 = vsel %vm132, %v114, 0
    %v143 = vsel %vm132, %v115, 0
    %v146 = vsel %vm132, %v116, 0
    %v149 = vsel %vm132, %v117, 0
    %v152 = vsel %vm132, %v118, 0
    %v155 = vsel %vm132, %v119, 0
    %157 = vmatpush.bf16.msra.mxu0 0
    %158 = vmatpush.bf16.msra.mxu0 0
    %159 = vmatpush.bf16.msra.mxu0 0
    %160 = vmatpush.bf16.msra.mxu0 0
    %161 = vmatpush.bf16.msra.mxu0 0
    %162 = vmatpush.bf16.msra.mxu0 0
    %163 = vmatpush.bf16.msra.mxu0 %v129
    %164 = vmatpush.bf16.msra.mxu0 %v128
    %165 = vmatmul.bf16.gmra.mxu0 %v134
    %v166 = vpop.f32.mrf.mxu0
    %v167 = vadd.f32 %v78, %v166
    %v168 = vpop.f32.mrf.mxu0
    %v169 = vadd.f32 %v78, %v168
    %170 = vmatmul.bf16.gmra.mxu0 %v137
    %v171 = vpop.f32.mrf.mxu0
    %v172 = vadd.f32 %v78, %v171
    %v173 = vpop.f32.mrf.mxu0
    %v174 = vadd.f32 %v78, %v173
    %175 = vmatmul.bf16.gmra.mxu0 %v140
    %v176 = vpop.f32.mrf.mxu0
    %v177 = vadd.f32 %v78, %v176
    %v178 = vpop.f32.mrf.mxu0
    %v179 = vadd.f32 %v78, %v178
    %180 = vmatmul.bf16.gmra.mxu0 %v143
    %v181 = vpop.f32.mrf.mxu0
    %v182 = vadd.f32 %v78, %v181
    %v183 = vpop.f32.mrf.mxu0
    %v184 = vadd.f32 %v78, %v183
    %185 = vmatmul.bf16.gmra.mxu0 %v146
    %v186 = vpop.f32.mrf.mxu0
    %v187 = vadd.f32 %v78, %v186
    %v188 = vpop.f32.mrf.mxu0
    %v189 = vadd.f32 %v78, %v188
    %190 = vmatmul.bf16.gmra.mxu0 %v149
    %v191 = vpop.f32.mrf.mxu0
    %v192 = vadd.f32 %v78, %v191
    %v193 = vpop.f32.mrf.mxu0
    %v194 = vadd.f32 %v78, %v193
    %195 = vmatmul.bf16.gmra.mxu0 %v152
    %v196 = vpop.f32.mrf.mxu0
    %v197 = vadd.f32 %v78, %v196
    %v198 = vpop.f32.mrf.mxu0
    %v199 = vadd.f32 %v78, %v198
    %200 = vmatmul.bf16.gmra.mxu0 %v155
    %v201 = vpop.f32.mrf.mxu0
    %v202 = vadd.f32 %v78, %v201
    %v203 = vpop.f32.mrf.mxu0
    %v204 = vadd.f32 %v78, %v203
    %205 = vdwg.mxu0
    %vm206 = vcmp.gt.f32.partialorder %v167, 0.0
    %vm207 = vcmp.gt.f32.partialorder %v169, 0.0
    %vm208 = vcmp.gt.f32.partialorder %v172, 0.0
    %vm209 = vcmp.gt.f32.partialorder %v174, 0.0
    %vm210 = vcmp.gt.f32.partialorder %v177, 0.0
    %vm211 = vcmp.gt.f32.partialorder %v179, 0.0
    %vm212 = vcmp.gt.f32.partialorder %v182, 0.0
    %vm213 = vcmp.gt.f32.partialorder %v184, 0.0
    %vm214 = vcmp.gt.f32.partialorder %v187, 0.0
    %vm215 = vcmp.gt.f32.partialorder %v189, 0.0
    %vm216 = vcmp.gt.f32.partialorder %v192, 0.0
    %vm217 = vcmp.gt.f32.partialorder %v194, 0.0
    %vm218 = vcmp.gt.f32.partialorder %v197, 0.0
    %vm219 = vcmp.gt.f32.partialorder %v199, 0.0
    %vm220 = vcmp.gt.f32.partialorder %v202, 0.0
    %vm221 = vcmp.gt.f32.partialorder %v204, 0.0
    %v222 = vld [vmem:[%s3] sm:$0x1]
    %v224 = vperm.slane %v222, 0
    %v226 = vmul.f32 %v224, %v167
    %v227 = vmul.f32 %v224, %v169
    %v228 = vmul.f32 %v224, %v172
    %v229 = vmul.f32 %v224, %v174
    %v230 = vmul.f32 %v224, %v177
    %v231 = vmul.f32 %v224, %v179
    %v232 = vmul.f32 %v224, %v182
    %v233 = vmul.f32 %v224, %v184
    %v234 = vmul.f32 %v224, %v187
    %v235 = vmul.f32 %v224, %v189
    %v236 = vmul.f32 %v224, %v192
    %v237 = vmul.f32 %v224, %v194
    %v238 = vmul.f32 %v224, %v197
    %v239 = vmul.f32 %v224, %v199
    %v240 = vmul.f32 %v224, %v202
    %v241 = vmul.f32 %v224, %v204
    %v242 = vsel %vm206, %v167, %v226
    %v243 = vsel %vm207, %v169, %v227
    %v244 = vsel %vm208, %v172, %v228
    %v245 = vsel %vm209, %v174, %v229
    %v246 = vsel %vm210, %v177, %v230
    %v247 = vsel %vm211, %v179, %v231
    %v248 = vsel %vm212, %v182, %v232
    %v249 = vsel %vm213, %v184, %v233
    %v250 = vsel %vm214, %v187, %v234
    %v251 = vsel %vm215, %v189, %v235
    %v252 = vsel %vm216, %v192, %v236
    %v253 = vsel %vm217, %v194, %v237
    %v254 = vsel %vm218, %v197, %v238
    %v255 = vsel %vm219, %v199, %v239
    %v256 = vsel %vm220, %v202, %v240
    %v257 = vsel %vm221, %v204, %v241
    %vm258 = vcmask 64512
    %259 = vst.msk [vmem:[#allocation2] sm:$0xff] %vm258, 0.0
    %vm260 = vcmask 58368
    %261 = vst.msk [vmem:[#allocation2 + $0x8] sm:$0x3] %vm260, 0.0
    %262 = vst.msk [vmem:[#allocation2 + $0xa0] sm:$0xff] %vm258, 0.0
    %263 = vst.msk [vmem:[#allocation2 + $0xa8] sm:$0x3] %vm260, 0.0
    %s264 = scalar_lea.vmem [#allocation2], 144
    %265 = vst.msk [vmem:[%s264] sm:$0xff] %vm258, 0.0
    %266 = vst.msk [vmem:[%s264 + $0x8] sm:$0x3] %vm260, 0.0
    %267 = vst.msk [vmem:[%s264 + $0xa0] sm:$0xff] %vm258, 0.0
    %268 = vst.msk [vmem:[%s264 + $0xa8] sm:$0x3] %vm260, 0.0
    %s269 = scalar_lea.vmem [#allocation2], 16
    %vm270 = vcmask 57344
    %271 = vst.msk [vmem:[%s269] sm:$0x1] %vm270, 0.0
    %272 = vst.msk [vmem:[%s269 + $0x10] sm:$0x1] %vm270, 0.0
    %273 = vst.msk [vmem:[%s269 + $0x20] sm:$0x1] %vm270, 0.0
    %274 = vst.msk [vmem:[%s269 + $0x30] sm:$0x1] %vm270, 0.0
    %275 = vst.msk [vmem:[%s269 + $0x40] sm:$0x1] %vm270, 0.0
    %276 = vst.msk [vmem:[%s269 + $0x50] sm:$0x1] %vm270, 0.0
    %277 = vst.msk [vmem:[%s269 + $0x60] sm:$0x1] %vm270, 0.0
    %278 = vst.msk [vmem:[%s269 + $0x70] sm:$0x1] %vm270, 0.0
    %279 = vst.msk [vmem:[%s269 + $0xa0] sm:$0x1] %vm270, 0.0
    %280 = vst.msk [vmem:[%s269 + $0xb0] sm:$0x1] %vm270, 0.0
    %281 = vst.msk [vmem:[%s269 + $0xc0] sm:$0x1] %vm270, 0.0
    %282 = vst.msk [vmem:[%s269 + $0xd0] sm:$0x1] %vm270, 0.0
    %283 = vst.msk [vmem:[%s269 + $0xe0] sm:$0x1] %vm270, 0.0
    %284 = vst.msk [vmem:[%s269 + $0xf0] sm:$0x1] %vm270, 0.0
    %285 = vst.msk [vmem:[%s269 + $0x100] sm:$0x1] %vm270, 0.0
    %286 = vst.msk [vmem:[%s269 + $0x110] sm:$0x1] %vm270, 0.0
    %287 = vst.msk [vmem:[%s269 + $0x9] sm:$0x1] %vm270, 0.0
    %288 = vst.msk [vmem:[%s269 + $0x19] sm:$0x1] %vm270, 0.0
    %289 = vst.msk [vmem:[%s269 + $0x29] sm:$0x1] %vm270, 0.0
    %290 = vst.msk [vmem:[%s269 + $0x39] sm:$0x1] %vm270, 0.0
    %291 = vst.msk [vmem:[%s269 + $0x49] sm:$0x1] %vm270, 0.0
    %292 = vst.msk [vmem:[%s269 + $0x59] sm:$0x1] %vm270, 0.0
    %293 = vst.msk [vmem:[%s269 + $0x69] sm:$0x1] %vm270, 0.0
    %294 = vst.msk [vmem:[%s269 + $0x79] sm:$0x1] %vm270, 0.0
    %295 = vst.msk [vmem:[%s269 + $0xa9] sm:$0x1] %vm270, 0.0
    %296 = vst.msk [vmem:[%s269 + $0xb9] sm:$0x1] %vm270, 0.0
    %297 = vst.msk [vmem:[%s269 + $0xc9] sm:$0x1] %vm270, 0.0
    %298 = vst.msk [vmem:[%s269 + $0xd9] sm:$0x1] %vm270, 0.0
    %299 = vst.msk [vmem:[%s269 + $0xe9] sm:$0x1] %vm270, 0.0
    %300 = vst.msk [vmem:[%s269 + $0xf9] sm:$0x1] %vm270, 0.0
    %301 = vst.msk [vmem:[%s269 + $0x109] sm:$0x1] %vm270, 0.0
    %302 = vst.msk [vmem:[%s269 + $0x119] sm:$0x1] %vm270, 0.0
    %303 = vst.msk [vmem:[%s269 + $0x1] sm:$0xff] %vm258, %v242
    %304 = vst.msk [vmem:[%s269 + $0x11] sm:$0xff] %vm258, %v243
    %305 = vst.msk [vmem:[%s269 + $0x21] sm:$0xff] %vm258, %v244
    %306 = vst.msk [vmem:[%s269 + $0x31] sm:$0xff] %vm258, %v245
    %307 = vst.msk [vmem:[%s269 + $0x41] sm:$0xff] %vm258, %v246
    %308 = vst.msk [vmem:[%s269 + $0x51] sm:$0xff] %vm258, %v247
    %309 = vst.msk [vmem:[%s269 + $0x61] sm:$0xff] %vm258, %v248
    %310 = vst.msk [vmem:[%s269 + $0x71] sm:$0xff] %vm258, %v249
    %311 = vst.msk [vmem:[%s269 + $0xa1] sm:$0xff] %vm258, %v250
    %312 = vst.msk [vmem:[%s269 + $0xb1] sm:$0xff] %vm258, %v251
    %313 = vst.msk [vmem:[%s269 + $0xc1] sm:$0xff] %vm258, %v252
    %314 = vst.msk [vmem:[%s269 + $0xd1] sm:$0xff] %vm258, %v253
    %315 = vst.msk [vmem:[%s269 + $0xe1] sm:$0xff] %vm258, %v254
    %316 = vst.msk [vmem:[%s269 + $0xf1] sm:$0xff] %vm258, %v255
    %317 = vst.msk [vmem:[%s269 + $0x101] sm:$0xff] %vm258, %v256
    %318 = vst.msk [vmem:[%s269 + $0x111] sm:$0xff] %vm258, %v257
    %v319 = vld [vmem:[%s4] sm:$0x7]
    %v320 = vld [vmem:[%s4 + $0x4] sm:$0x7]
    %v321 = vld [vmem:[%s4 + $0x8] sm:$0x7]
    %v322 = vld [vmem:[#allocation2] sm:$0xff]
    %v323 = vld [vmem:[#allocation2 + $0x10] sm:$0xff]
    %v324 = vld [vmem:[#allocation2 + $0x20] sm:$0xff]
    %v325 = vld [vmem:[#allocation2 + $0x30] sm:$0xff]
    %v326 = vld [vmem:[#allocation2 + $0x40] sm:$0xff]
    %v327 = vld [vmem:[#allocation2 + $0x50] sm:$0xff]
    %v328 = vld [vmem:[#allocation2 + $0x60] sm:$0xff]
    %v329 = vld [vmem:[#allocation2 + $0x70] sm:$0xff]
    %v330 = vld [vmem:[#allocation2 + $0xa0] sm:$0xff]
    %v331 = vld [vmem:[#allocation2 + $0xb0] sm:$0xff]
    %v332 = vld [vmem:[#allocation2 + $0xc0] sm:$0xff]
    %v333 = vld [vmem:[#allocation2 + $0xd0] sm:$0xff]
    %v334 = vld [vmem:[#allocation2 + $0xe0] sm:$0xff]
    %v335 = vld [vmem:[#allocation2 + $0xf0] sm:$0xff]
    %v336 = vld [vmem:[#allocation2 + $0x100] sm:$0xff]
    %v337 = vld [vmem:[#allocation2 + $0x110] sm:$0xff]
    %v338 = vperm.slane %v319, 0
    %v339 = vmul.f32 %v322, %v338
    %v340 = vmul.f32 %v323, %v338
    %v341 = vmul.f32 %v324, %v338
    %v342 = vmul.f32 %v325, %v338
    %v343 = vmul.f32 %v326, %v338
    %v344 = vmul.f32 %v327, %v338
    %v345 = vmul.f32 %v328, %v338
    %v346 = vmul.f32 %v329, %v338
    %v347 = vmul.f32 %v330, %v338
    %v348 = vmul.f32 %v331, %v338
    %v349 = vmul.f32 %v332, %v338
    %v350 = vmul.f32 %v333, %v338
    %v351 = vmul.f32 %v334, %v338
    %v352 = vmul.f32 %v335, %v338
    %v353 = vmul.f32 %v336, %v338
    %v354 = vmul.f32 %v337, %v338
    %v355 = vadd.f32 %v339, 0.0
    %v356 = vadd.f32 %v340, 0.0
    %v357 = vadd.f32 %v341, 0.0
    %v358 = vadd.f32 %v342, 0.0
    %v359 = vadd.f32 %v343, 0.0
    %v360 = vadd.f32 %v344, 0.0
    %v361 = vadd.f32 %v345, 0.0
    %v362 = vadd.f32 %v346, 0.0
    %v363 = vadd.f32 %v347, 0.0
    %v364 = vadd.f32 %v348, 0.0
    %v365 = vadd.f32 %v349, 0.0
    %v366 = vadd.f32 %v350, 0.0
    %v367 = vadd.f32 %v351, 0.0
    %v368 = vadd.f32 %v352, 0.0
    %v369 = vadd.f32 %v353, 0.0
    %v370 = vadd.f32 %v354, 0.0
    %v371 = vld [vmem:[#allocation2 + $0x1] sm:$0xff]
    %v372 = vld [vmem:[#allocation2 + $0x11] sm:$0xff]
    %v373 = vld [vmem:[#allocation2 + $0x21] sm:$0xff]
    %v374 = vld [vmem:[#allocation2 + $0x31] sm:$0xff]
    %v375 = vld [vmem:[#allocation2 + $0x41] sm:$0xff]
    %v376 = vld [vmem:[#allocation2 + $0x51] sm:$0xff]
    %v377 = vld [vmem:[#allocation2 + $0x61] sm:$0xff]
    %v378 = vld [vmem:[#allocation2 + $0x71] sm:$0xff]
    %v379 = vld [vmem:[#allocation2 + $0xa1] sm:$0xff]
    %v380 = vld [vmem:[#allocation2 + $0xb1] sm:$0xff]
    %v381 = vld [vmem:[#allocation2 + $0xc1] sm:$0xff]
    %v382 = vld [vmem:[#allocation2 + $0xd1] sm:$0xff]
    %v383 = vld [vmem:[#allocation2 + $0xe1] sm:$0xff]
    %v384 = vld [vmem:[#allocation2 + $0xf1] sm:$0xff]
    %v385 = vld [vmem:[#allocation2 + $0x101] sm:$0xff]
    %v386 = vld [vmem:[#allocation2 + $0x111] sm:$0xff]
    %v387 = vperm.slane %v319, 1
    %v388 = vmul.f32 %v371, %v387
    %v389 = vmul.f32 %v372, %v387
    %v390 = vmul.f32 %v373, %v387
    %v391 = vmul.f32 %v374, %v387
    %v392 = vmul.f32 %v375, %v387
    %v393 = vmul.f32 %v376, %v387
    %v394 = vmul.f32 %v377, %v387
    %v395 = vmul.f32 %v378, %v387
    %v396 = vmul.f32 %v379, %v387
    %v397 = vmul.f32 %v380, %v387
    %v398 = vmul.f32 %v381, %v387
    %v399 = vmul.f32 %v382, %v387
    %v400 = vmul.f32 %v383, %v387
    %v401 = vmul.f32 %v384, %v387
    %v402 = vmul.f32 %v385, %v387
    %v403 = vmul.f32 %v386, %v387
    %v404 = vadd.f32 %v355, %v388
    %v405 = vadd.f32 %v356, %v389
    %v406 = vadd.f32 %v357, %v390
    %v407 = vadd.f32 %v358, %v391
    %v408 = vadd.f32 %v359, %v392
    %v409 = vadd.f32 %v360, %v393
    %v410 = vadd.f32 %v361, %v394
    %v411 = vadd.f32 %v362, %v395
    %v412 = vadd.f32 %v363, %v396
    %v413 = vadd.f32 %v364, %v397
    %v414 = vadd.f32 %v365, %v398
    %v415 = vadd.f32 %v366, %v399
    %v416 = vadd.f32 %v367, %v400
    %v417 = vadd.f32 %v368, %v401
    %v418 = vadd.f32 %v369, %v402
    %v419 = vadd.f32 %v370, %v403
    %v420 = vld [vmem:[#allocation2 + $0x2] sm:$0xff]
    %v421 = vld [vmem:[#allocation2 + $0x12] sm:$0xff]
    %v422 = vld [vmem:[#allocation2 + $0x22] sm:$0xff]
    %v423 = vld [vmem:[#allocation2 + $0x32] sm:$0xff]
    %v424 = vld [vmem:[#allocation2 + $0x42] sm:$0xff]
    %v425 = vld [vmem:[#allocation2 + $0x52] sm:$0xff]
    %v426 = vld [vmem:[#allocation2 + $0x62] sm:$0xff]
    %v427 = vld [vmem:[#allocation2 + $0x72] sm:$0xff]
    %v428 = vld [vmem:[#allocation2 + $0xa2] sm:$0xff]
    %v429 = vld [vmem:[#allocation2 + $0xb2] sm:$0xff]
    %v430 = vld [vmem:[#allocation2 + $0xc2] sm:$0xff]
    %v431 = vld [vmem:[#allocation2 + $0xd2] sm:$0xff]
    %v432 = vld [vmem:[#allocation2 + $0xe2] sm:$0xff]
    %v433 = vld [vmem:[#allocation2 + $0xf2] sm:$0xff]
    %v434 = vld [vmem:[#allocation2 + $0x102] sm:$0xff]
    %v435 = vld [vmem:[#allocation2 + $0x112] sm:$0xff]
    %v436 = vperm.slane %v319, 2
    %v437 = vmul.f32 %v420, %v436
    %v438 = vmul.f32 %v421, %v436
    %v439 = vmul.f32 %v422, %v436
    %v440 = vmul.f32 %v423, %v436
    %v441 = vmul.f32 %v424, %v436
    %v442 = vmul.f32 %v425, %v436
    %v443 = vmul.f32 %v426, %v436
    %v444 = vmul.f32 %v427, %v436
    %v445 = vmul.f32 %v428, %v436
    %v446 = vmul.f32 %v429, %v436
    %v447 = vmul.f32 %v430, %v436
    %v448 = vmul.f32 %v431, %v436
    %v449 = vmul.f32 %v432, %v436
    %v450 = vmul.f32 %v433, %v436
    %v451 = vmul.f32 %v434, %v436
    %v452 = vmul.f32 %v435, %v436
    %v453 = vadd.f32 %v404, %v437
    %v454 = vadd.f32 %v405, %v438
    %v455 = vadd.f32 %v406, %v439
    %v456 = vadd.f32 %v407, %v440
    %v457 = vadd.f32 %v408, %v441
    %v458 = vadd.f32 %v409, %v442
    %v459 = vadd.f32 %v410, %v443
    %v460 = vadd.f32 %v411, %v444
    %v461 = vadd.f32 %v412, %v445
    %v462 = vadd.f32 %v413, %v446
    %v463 = vadd.f32 %v414, %v447
    %v464 = vadd.f32 %v415, %v448
    %v465 = vadd.f32 %v416, %v449
    %v466 = vadd.f32 %v417, %v450
    %v467 = vadd.f32 %v418, %v451
    %v468 = vadd.f32 %v419, %v452
    %v469 = vld [vmem:[%s269] sm:$0xff]
    %v470 = vld [vmem:[%s269 + $0x10] sm:$0xff]
    %v471 = vld [vmem:[%s269 + $0x20] sm:$0xff]
    %v472 = vld [vmem:[%s269 + $0x30] sm:$0xff]
    %v473 = vld [vmem:[%s269 + $0x40] sm:$0xff]
    %v474 = vld [vmem:[%s269 + $0x50] sm:$0xff]
    %v475 = vld [vmem:[%s269 + $0x60] sm:$0xff]
    %v476 = vld [vmem:[%s269 + $0x70] sm:$0xff]
    %v477 = vld [vmem:[%s269 + $0xa0] sm:$0xff]
    %v478 = vld [vmem:[%s269 + $0xb0] sm:$0xff]
    %v479 = vld [vmem:[%s269 + $0xc0] sm:$0xff]
    %v480 = vld [vmem:[%s269 + $0xd0] sm:$0xff]
    %v481 = vld [vmem:[%s269 + $0xe0] sm:$0xff]
    %v482 = vld [vmem:[%s269 + $0xf0] sm:$0xff]
    %v483 = vld [vmem:[%s269 + $0x100] sm:$0xff]
    %v484 = vld [vmem:[%s269 + $0x110] sm:$0xff]
    %v485 = vperm.slane %v320, 0
    %v486 = vmul.f32 %v469, %v485
    %v487 = vmul.f32 %v470, %v485
    %v488 = vmul.f32 %v471, %v485
    %v489 = vmul.f32 %v472, %v485
    %v490 = vmul.f32 %v473, %v485
    %v491 = vmul.f32 %v474, %v485
    %v492 = vmul.f32 %v475, %v485
    %v493 = vmul.f32 %v476, %v485
    %v494 = vmul.f32 %v477, %v485
    %v495 = vmul.f32 %v478, %v485
    %v496 = vmul.f32 %v479, %v485
    %v497 = vmul.f32 %v480, %v485
    %v498 = vmul.f32 %v481, %v485
    %v499 = vmul.f32 %v482, %v485
    %v500 = vmul.f32 %v483, %v485
    %v501 = vmul.f32 %v484, %v485
    %v502 = vadd.f32 %v453, %v486
    %v503 = vadd.f32 %v454, %v487
    %v504 = vadd.f32 %v455, %v488
    %v505 = vadd.f32 %v456, %v489
    %v506 = vadd.f32 %v457, %v490
    %v507 = vadd.f32 %v458, %v491
    %v508 = vadd.f32 %v459, %v492
    %v509 = vadd.f32 %v460, %v493
    %v510 = vadd.f32 %v461, %v494
    %v511 = vadd.f32 %v462, %v495
    %v512 = vadd.f32 %v463, %v496
    %v513 = vadd.f32 %v464, %v497
    %v514 = vadd.f32 %v465, %v498
    %v515 = vadd.f32 %v466, %v499
    %v516 = vadd.f32 %v467, %v500
    %v517 = vadd.f32 %v468, %v501
    %v518 = vld [vmem:[%s269 + $0x1] sm:$0xff]
    %v519 = vld [vmem:[%s269 + $0x11] sm:$0xff]
    %v520 = vld [vmem:[%s269 + $0x21] sm:$0xff]
    %v521 = vld [vmem:[%s269 + $0x31] sm:$0xff]
    %v522 = vld [vmem:[%s269 + $0x41] sm:$0xff]
    %v523 = vld [vmem:[%s269 + $0x51] sm:$0xff]
    %v524 = vld [vmem:[%s269 + $0x61] sm:$0xff]
    %v525 = vld [vmem:[%s269 + $0x71] sm:$0xff]
    %v526 = vld [vmem:[%s269 + $0xa1] sm:$0xff]
    %v527 = vld [vmem:[%s269 + $0xb1] sm:$0xff]
    %v528 = vld [vmem:[%s269 + $0xc1] sm:$0xff]
    %v529 = vld [vmem:[%s269 + $0xd1] sm:$0xff]
    %v530 = vld [vmem:[%s269 + $0xe1] sm:$0xff]
    %v531 = vld [vmem:[%s269 + $0xf1] sm:$0xff]
    %v532 = vld [vmem:[%s269 + $0x101] sm:$0xff]
    %v533 = vld [vmem:[%s269 + $0x111] sm:$0xff]
    %v534 = vperm.slane %v320, 1
    %v535 = vmul.f32 %v518, %v534
    %v536 = vmul.f32 %v519, %v534
    %v537 = vmul.f32 %v520, %v534
    %v538 = vmul.f32 %v521, %v534
    %v539 = vmul.f32 %v522, %v534
    %v540 = vmul.f32 %v523, %v534
    %v541 = vmul.f32 %v524, %v534
    %v542 = vmul.f32 %v525, %v534
    %v543 = vmul.f32 %v526, %v534
    %v544 = vmul.f32 %v527, %v534
    %v545 = vmul.f32 %v528, %v534
    %v546 = vmul.f32 %v529, %v534
    %v547 = vmul.f32 %v530, %v534
    %v548 = vmul.f32 %v531, %v534
    %v549 = vmul.f32 %v532, %v534
    %v550 = vmul.f32 %v533, %v534
    %v551 = vadd.f32 %v502, %v535
    %v552 = vadd.f32 %v503, %v536
    %v553 = vadd.f32 %v504, %v537
    %v554 = vadd.f32 %v505, %v538
    %v555 = vadd.f32 %v506, %v539
    %v556 = vadd.f32 %v507, %v540
    %v557 = vadd.f32 %v508, %v541
    %v558 = vadd.f32 %v509, %v542
    %v559 = vadd.f32 %v510, %v543
    %v560 = vadd.f32 %v511, %v544
    %v561 = vadd.f32 %v512, %v545
    %v562 = vadd.f32 %v513, %v546
    %v563 = vadd.f32 %v514, %v547
    %v564 = vadd.f32 %v515, %v548
    %v565 = vadd.f32 %v516, %v549
    %v566 = vadd.f32 %v517, %v550
    %v567 = vld [vmem:[%s269 + $0x2] sm:$0xff]
    %v568 = vld [vmem:[%s269 + $0x12] sm:$0xff]
    %v569 = vld [vmem:[%s269 + $0x22] sm:$0xff]
    %v570 = vld [vmem:[%s269 + $0x32] sm:$0xff]
    %v571 = vld [vmem:[%s269 + $0x42] sm:$0xff]
    %v572 = vld [vmem:[%s269 + $0x52] sm:$0xff]
    %v573 = vld [vmem:[%s269 + $0x62] sm:$0xff]
    %v574 = vld [vmem:[%s269 + $0x72] sm:$0xff]
    %v575 = vld [vmem:[%s269 + $0xa2] sm:$0xff]
    %v576 = vld [vmem:[%s269 + $0xb2] sm:$0xff]
    %v577 = vld [vmem:[%s269 + $0xc2] sm:$0xff]
    %v578 = vld [vmem:[%s269 + $0xd2] sm:$0xff]
    %v579 = vld [vmem:[%s269 + $0xe2] sm:$0xff]
    %v580 = vld [vmem:[%s269 + $0xf2] sm:$0xff]
    %v581 = vld [vmem:[%s269 + $0x102] sm:$0xff]
    %v582 = vld [vmem:[%s269 + $0x112] sm:$0xff]
    %v583 = vperm.slane %v320, 2
    %v584 = vmul.f32 %v567, %v583
    %v585 = vmul.f32 %v568, %v583
    %v586 = vmul.f32 %v569, %v583
    %v587 = vmul.f32 %v570, %v583
    %v588 = vmul.f32 %v571, %v583
    %v589 = vmul.f32 %v572, %v583
    %v590 = vmul.f32 %v573, %v583
    %v591 = vmul.f32 %v574, %v583
    %v592 = vmul.f32 %v575, %v583
    %v593 = vmul.f32 %v576, %v583
    %v594 = vmul.f32 %v577, %v583
    %v595 = vmul.f32 %v578, %v583
    %v596 = vmul.f32 %v579, %v583
    %v597 = vmul.f32 %v580, %v583
    %v598 = vmul.f32 %v581, %v583
    %v599 = vmul.f32 %v582, %v583
    %v600 = vadd.f32 %v551, %v584
    %v601 = vadd.f32 %v552, %v585
    %v602 = vadd.f32 %v553, %v586
    %v603 = vadd.f32 %v554, %v587
    %v604 = vadd.f32 %v555, %v588
    %v605 = vadd.f32 %v556, %v589
    %v606 = vadd.f32 %v557, %v590
    %v607 = vadd.f32 %v558, %v591
    %v608 = vadd.f32 %v559, %v592
    %v609 = vadd.f32 %v560, %v593
    %v610 = vadd.f32 %v561, %v594
    %v611 = vadd.f32 %v562, %v595
    %v612 = vadd.f32 %v563, %v596
    %v613 = vadd.f32 %v564, %v597
    %v614 = vadd.f32 %v565, %v598
    %v615 = vadd.f32 %v566, %v599
    %s616 = scalar_lea.vmem [#allocation2], 32
    %v617 = vld [vmem:[%s616] sm:$0xff]
    %v618 = vld [vmem:[%s616 + $0x10] sm:$0xff]
    %v619 = vld [vmem:[%s616 + $0x20] sm:$0xff]
    %v620 = vld [vmem:[%s616 + $0x30] sm:$0xff]
    %v621 = vld [vmem:[%s616 + $0x40] sm:$0xff]
    %v622 = vld [vmem:[%s616 + $0x50] sm:$0xff]
    %v623 = vld [vmem:[%s616 + $0x60] sm:$0xff]
    %v624 = vld [vmem:[%s616 + $0x70] sm:$0xff]
    %v625 = vld [vmem:[%s616 + $0xa0] sm:$0xff]
    %v626 = vld [vmem:[%s616 + $0xb0] sm:$0xff]
    %v627 = vld [vmem:[%s616 + $0xc0] sm:$0xff]
    %v628 = vld [vmem:[%s616 + $0xd0] sm:$0xff]
    %v629 = vld [vmem:[%s616 + $0xe0] sm:$0xff]
    %v630 = vld [vmem:[%s616 + $0xf0] sm:$0xff]
    %v631 = vld [vmem:[%s616 + $0x100] sm:$0xff]
    %v632 = vld [vmem:[%s616 + $0x110] sm:$0xff]
    %v633 = vperm.slane %v321, 0
    %v634 = vmul.f32 %v617, %v633
    %v635 = vmul.f32 %v618, %v633
    %v636 = vmul.f32 %v619, %v633
    %v637 = vmul.f32 %v620, %v633
    %v638 = vmul.f32 %v621, %v633
    %v639 = vmul.f32 %v622, %v633
    %v640 = vmul.f32 %v623, %v633
    %v641 = vmul.f32 %v624, %v633
    %v642 = vmul.f32 %v625, %v633
    %v643 = vmul.f32 %v626, %v633
    %v644 = vmul.f32 %v627, %v633
    %v645 = vmul.f32 %v628, %v633
    %v646 = vmul.f32 %v629, %v633
    %v647 = vmul.f32 %v630, %v633
    %v648 = vmul.f32 %v631, %v633
    %v649 = vmul.f32 %v632, %v633
    %v650 = vadd.f32 %v600, %v634
    %v651 = vadd.f32 %v601, %v635
    %v652 = vadd.f32 %v602, %v636
    %v653 = vadd.f32 %v603, %v637
    %v654 = vadd.f32 %v604, %v638
    %v655 = vadd.f32 %v605, %v639
    %v656 = vadd.f32 %v606, %v640
    %v657 = vadd.f32 %v607, %v641
    %v658 = vadd.f32 %v608, %v642
    %v659 = vadd.f32 %v609, %v643
    %v660 = vadd.f32 %v610, %v644
    %v661 = vadd.f32 %v611, %v645
    %v662 = vadd.f32 %v612, %v646
    %v663 = vadd.f32 %v613, %v647
    %v664 = vadd.f32 %v614, %v648
    %v665 = vadd.f32 %v615, %v649
    %v666 = vld [vmem:[%s616 + $0x1] sm:$0xff]
    %v667 = vld [vmem:[%s616 + $0x11] sm:$0xff]
    %v668 = vld [vmem:[%s616 + $0x21] sm:$0xff]
    %v669 = vld [vmem:[%s616 + $0x31] sm:$0xff]
    %v670 = vld [vmem:[%s616 + $0x41] sm:$0xff]
    %v671 = vld [vmem:[%s616 + $0x51] sm:$0xff]
    %v672 = vld [vmem:[%s616 + $0x61] sm:$0xff]
    %v673 = vld [vmem:[%s616 + $0x71] sm:$0xff]
    %v674 = vld [vmem:[%s616 + $0xa1] sm:$0xff]
    %v675 = vld [vmem:[%s616 + $0xb1] sm:$0xff]
    %v676 = vld [vmem:[%s616 + $0xc1] sm:$0xff]
    %v677 = vld [vmem:[%s616 + $0xd1] sm:$0xff]
    %v678 = vld [vmem:[%s616 + $0xe1] sm:$0xff]
    %v679 = vld [vmem:[%s616 + $0xf1] sm:$0xff]
    %v680 = vld [vmem:[%s616 + $0x101] sm:$0xff]
    %v681 = vld [vmem:[%s616 + $0x111] sm:$0xff]
    %v682 = vperm.slane %v321, 1
    %v683 = vmul.f32 %v666, %v682
    %v684 = vmul.f32 %v667, %v682
    %v685 = vmul.f32 %v668, %v682
    %v686 = vmul.f32 %v669, %v682
    %v687 = vmul.f32 %v670, %v682
    %v688 = vmul.f32 %v671, %v682
    %v689 = vmul.f32 %v672, %v682
    %v690 = vmul.f32 %v673, %v682
    %v691 = vmul.f32 %v674, %v682
    %v692 = vmul.f32 %v675, %v682
    %v693 = vmul.f32 %v676, %v682
    %v694 = vmul.f32 %v677, %v682
    %v695 = vmul.f32 %v678, %v682
    %v696 = vmul.f32 %v679, %v682
    %v697 = vmul.f32 %v680, %v682
    %v698 = vmul.f32 %v681, %v682
    %v699 = vadd.f32 %v650, %v683
    %v700 = vadd.f32 %v651, %v684
    %v701 = vadd.f32 %v652, %v685
    %v702 = vadd.f32 %v653, %v686
    %v703 = vadd.f32 %v654, %v687
    %v704 = vadd.f32 %v655, %v688
    %v705 = vadd.f32 %v656, %v689
    %v706 = vadd.f32 %v657, %v690
    %v707 = vadd.f32 %v658, %v691
    %v708 = vadd.f32 %v659, %v692
    %v709 = vadd.f32 %v660, %v693
    %v710 = vadd.f32 %v661, %v694
    %v711 = vadd.f32 %v662, %v695
    %v712 = vadd.f32 %v663, %v696
    %v713 = vadd.f32 %v664, %v697
    %v714 = vadd.f32 %v665, %v698
    %v715 = vld [vmem:[%s616 + $0x2] sm:$0xff]
    %v716 = vld [vmem:[%s616 + $0x12] sm:$0xff]
    %v717 = vld [vmem:[%s616 + $0x22] sm:$0xff]
    %v718 = vld [vmem:[%s616 + $0x32] sm:$0xff]
    %v719 = vld [vmem:[%s616 + $0x42] sm:$0xff]
    %v720 = vld [vmem:[%s616 + $0x52] sm:$0xff]
    %v721 = vld [vmem:[%s616 + $0x62] sm:$0xff]
    %v722 = vld [vmem:[%s616 + $0x72] sm:$0xff]
    %v723 = vld [vmem:[%s616 + $0xa2] sm:$0xff]
    %v724 = vld [vmem:[%s616 + $0xb2] sm:$0xff]
    %v725 = vld [vmem:[%s616 + $0xc2] sm:$0xff]
    %v726 = vld [vmem:[%s616 + $0xd2] sm:$0xff]
    %v727 = vld [vmem:[%s616 + $0xe2] sm:$0xff]
    %v728 = vld [vmem:[%s616 + $0xf2] sm:$0xff]
    %v729 = vld [vmem:[%s616 + $0x102] sm:$0xff]
    %v730 = vld [vmem:[%s616 + $0x112] sm:$0xff]
    %v731 = vperm.slane %v321, 2
    %v732 = vmul.f32 %v715, %v731
    %v733 = vmul.f32 %v716, %v731
    %v734 = vmul.f32 %v717, %v731
    %v735 = vmul.f32 %v718, %v731
    %v736 = vmul.f32 %v719, %v731
    %v737 = vmul.f32 %v720, %v731
    %v738 = vmul.f32 %v721, %v731
    %v739 = vmul.f32 %v722, %v731
    %v740 = vmul.f32 %v723, %v731
    %v741 = vmul.f32 %v724, %v731
    %v742 = vmul.f32 %v725, %v731
    %v743 = vmul.f32 %v726, %v731
    %v744 = vmul.f32 %v727, %v731
    %v745 = vmul.f32 %v728, %v731
    %v746 = vmul.f32 %v729, %v731
    %v747 = vmul.f32 %v730, %v731
    %v748 = vadd.f32 %v699, %v732
    %v749 = vadd.f32 %v700, %v733
    %v750 = vadd.f32 %v701, %v734
    %v751 = vadd.f32 %v702, %v735
    %v752 = vadd.f32 %v703, %v736
    %v753 = vadd.f32 %v704, %v737
    %v754 = vadd.f32 %v705, %v738
    %v755 = vadd.f32 %v706, %v739
    %v756 = vadd.f32 %v707, %v740
    %v757 = vadd.f32 %v708, %v741
    %v758 = vadd.f32 %v709, %v742
    %v759 = vadd.f32 %v710, %v743
    %v760 = vadd.f32 %v711, %v744
    %v761 = vadd.f32 %v712, %v745
    %v762 = vadd.f32 %v713, %v746
    %v763 = vadd.f32 %v714, %v747
    %v764 = vpack.c.bf16 %v749, %v748
    %v765 = vpack.c.bf16 %v751, %v750
    %v766 = vpack.c.bf16 %v753, %v752
    %v767 = vpack.c.bf16 %v755, %v754
    %v768 = vpack.c.bf16 %v757, %v756
    %v769 = vpack.c.bf16 %v759, %v758
    %v770 = vpack.c.bf16 %v761, %v760
    %v771 = vpack.c.bf16 %v763, %v762
    %v772 = vld [vmem:[%s5] sm:$0xf]
    %v773 = vld [vmem:[%s6] sm:$0x1]
    %v775 = vperm.slane %v773, 0
    %v778 = vsel %vm258, %v764, 0
    %v781 = vsel %vm258, %v765, 0
    %v784 = vsel %vm258, %v766, 0
    %v787 = vsel %vm258, %v767, 0
    %v790 = vsel %vm258, %v768, 0
    %v793 = vsel %vm258, %v769, 0
    %v796 = vsel %vm258, %v770, 0
    %v799 = vsel %vm258, %v771, 0
    %vm801 = vcmask 1043456
    %v803 = vsel %vm801, %v772, 0
    %805 = vmatpush.bf16.msra.mxu0 0
    %806 = vmatpush.bf16.msra.mxu0 0
    %807 = vmatpush.bf16.msra.mxu0 0
    %808 = vmatpush.bf16.msra.mxu0 0
    %809 = vmatpush.bf16.msra.mxu0 0
    %810 = vmatpush.bf16.msra.mxu0 0
    %811 = vmatpush.bf16.msra.mxu0 0
    %812 = vmatpush.bf16.msra.mxu0 %v803
    %813 = vmatmul.bf16.gmra.mxu0 %v778
    %v814 = vpop.f32.mrf.mxu0
    %v815 = vadd.f32 %v775, %v814
    %v816 = vpop.f32.mrf.mxu0
    %v817 = vadd.f32 %v775, %v816
    %818 = vmatmul.bf16.gmra.mxu0 %v781
    %v819 = vpop.f32.mrf.mxu0
    %v820 = vadd.f32 %v775, %v819
    %v821 = vpop.f32.mrf.mxu0
    %v822 = vadd.f32 %v775, %v821
    %823 = vmatmul.bf16.gmra.mxu0 %v784
    %v824 = vpop.f32.mrf.mxu0
    %v825 = vadd.f32 %v775, %v824
    %v826 = vpop.f32.mrf.mxu0
    %v827 = vadd.f32 %v775, %v826
    %828 = vmatmul.bf16.gmra.mxu0 %v787
    %v829 = vpop.f32.mrf.mxu0
    %v830 = vadd.f32 %v775, %v829
    %v831 = vpop.f32.mrf.mxu0
    %v832 = vadd.f32 %v775, %v831
    %833 = vmatmul.bf16.gmra.mxu0 %v790
    %v834 = vpop.f32.mrf.mxu0
    %v835 = vadd.f32 %v775, %v834
    %v836 = vpop.f32.mrf.mxu0
    %v837 = vadd.f32 %v775, %v836
    %838 = vmatmul.bf16.gmra.mxu0 %v793
    %v839 = vpop.f32.mrf.mxu0
    %v840 = vadd.f32 %v775, %v839
    %v841 = vpop.f32.mrf.mxu0
    %v842 = vadd.f32 %v775, %v841
    %843 = vmatmul.bf16.gmra.mxu0 %v796
    %v844 = vpop.f32.mrf.mxu0
    %v845 = vadd.f32 %v775, %v844
    %v846 = vpop.f32.mrf.mxu0
    %v847 = vadd.f32 %v775, %v846
    %848 = vmatmul.bf16.gmra.mxu0 %v799
    %v849 = vpop.f32.mrf.mxu0
    %v850 = vadd.f32 %v775, %v849
    %v851 = vpop.f32.mrf.mxu0
    %v852 = vadd.f32 %v775, %v851
    %853 = vdwg.mxu0
    %vm854 = vcmp.gt.f32.partialorder %v815, 0.0
    %vm855 = vcmp.gt.f32.partialorder %v817, 0.0
    %vm856 = vcmp.gt.f32.partialorder %v820, 0.0
    %vm857 = vcmp.gt.f32.partialorder %v822, 0.0
    %vm858 = vcmp.gt.f32.partialorder %v825, 0.0
    %vm859 = vcmp.gt.f32.partialorder %v827, 0.0
    %vm860 = vcmp.gt.f32.partialorder %v830, 0.0
    %vm861 = vcmp.gt.f32.partialorder %v832, 0.0
    %vm862 = vcmp.gt.f32.partialorder %v835, 0.0
    %vm863 = vcmp.gt.f32.partialorder %v837, 0.0
    %vm864 = vcmp.gt.f32.partialorder %v840, 0.0
    %vm865 = vcmp.gt.f32.partialorder %v842, 0.0
    %vm866 = vcmp.gt.f32.partialorder %v845, 0.0
    %vm867 = vcmp.gt.f32.partialorder %v847, 0.0
    %vm868 = vcmp.gt.f32.partialorder %v850, 0.0
    %vm869 = vcmp.gt.f32.partialorder %v852, 0.0
    %v870 = vld [vmem:[%s7] sm:$0x1]
    %v872 = vperm.slane %v870, 0
    %v874 = vmul.f32 %v872, %v815
    %v875 = vmul.f32 %v872, %v817
    %v876 = vmul.f32 %v872, %v820
    %v877 = vmul.f32 %v872, %v822
    %v878 = vmul.f32 %v872, %v825
    %v879 = vmul.f32 %v872, %v827
    %v880 = vmul.f32 %v872, %v830
    %v881 = vmul.f32 %v872, %v832
    %v882 = vmul.f32 %v872, %v835
    %v883 = vmul.f32 %v872, %v837
    %v884 = vmul.f32 %v872, %v840
    %v885 = vmul.f32 %v872, %v842
    %v886 = vmul.f32 %v872, %v845
    %v887 = vmul.f32 %v872, %v847
    %v888 = vmul.f32 %v872, %v850
    %v889 = vmul.f32 %v872, %v852
    %v890 = vsel %vm854, %v815, %v874
    %v891 = vsel %vm855, %v817, %v875
    %v892 = vsel %vm856, %v820, %v876
    %v893 = vsel %vm857, %v822, %v877
    %v894 = vsel %vm858, %v825, %v878
    %v895 = vsel %vm859, %v827, %v879
    %v896 = vsel %vm860, %v830, %v880
    %v897 = vsel %vm861, %v832, %v881
    %v898 = vsel %vm862, %v835, %v882
    %v899 = vsel %vm863, %v837, %v883
    %v900 = vsel %vm864, %v840, %v884
    %v901 = vsel %vm865, %v842, %v885
    %v902 = vsel %vm866, %v845, %v886
    %v903 = vsel %vm867, %v847, %v887
    %v904 = vsel %vm868, %v850, %v888
    %v905 = vsel %vm869, %v852, %v889
    %v906 = vpack.c.bf16 %v891, %v890
    %v907 = vpack.c.bf16 %v893, %v892
    %v908 = vpack.c.bf16 %v895, %v894
    %v909 = vpack.c.bf16 %v897, %v896
    %v910 = vpack.c.bf16 %v899, %v898
    %v911 = vpack.c.bf16 %v901, %v900
    %v912 = vpack.c.bf16 %v903, %v902
    %v913 = vpack.c.bf16 %v905, %v904
    %v914 = vld [vmem:[%s8] sm:$0xf]
    %v915 = vld [vmem:[%s9] sm:$0x1]
    %v917 = vperm.slane %v915, 0
    %v920 = vsel %vm258, %v906, 0
    %v923 = vsel %vm258, %v907, 0
    %v926 = vsel %vm258, %v908, 0
    %v929 = vsel %vm258, %v909, 0
    %v932 = vsel %vm258, %v910, 0
    %v935 = vsel %vm258, %v911, 0
    %v938 = vsel %vm258, %v912, 0
    %v941 = vsel %vm258, %v913, 0
    %v944 = vsel %vm801, %v914, 0
    %946 = vmatpush.bf16.msra.mxu0 0
    %947 = vmatpush.bf16.msra.mxu0 0
    %948 = vmatpush.bf16.msra.mxu0 0
    %949 = vmatpush.bf16.msra.mxu0 0
    %950 = vmatpush.bf16.msra.mxu0 0
    %951 = vmatpush.bf16.msra.mxu0 0
    %952 = vmatpush.bf16.msra.mxu0 0
    %953 = vmatpush.bf16.msra.mxu0 %v944
    %954 = vmatmul.bf16.gmra.mxu0 %v920
    %v955 = vpop.f32.mrf.mxu0
    %v956 = vadd.f32 %v917, %v955
    %v957 = vpop.f32.mrf.mxu0
    %v958 = vadd.f32 %v917, %v957
    %959 = vmatmul.bf16.gmra.mxu0 %v923
    %v960 = vpop.f32.mrf.mxu0
    %v961 = vadd.f32 %v917, %v960
    %v962 = vpop.f32.mrf.mxu0
    %v963 = vadd.f32 %v917, %v962
    %964 = vmatmul.bf16.gmra.mxu0 %v926
    %v965 = vpop.f32.mrf.mxu0
    %v966 = vadd.f32 %v917, %v965
    %v967 = vpop.f32.mrf.mxu0
    %v968 = vadd.f32 %v917, %v967
    %969 = vmatmul.bf16.gmra.mxu0 %v929
    %v970 = vpop.f32.mrf.mxu0
    %v971 = vadd.f32 %v917, %v970
    %v972 = vpop.f32.mrf.mxu0
    %v973 = vadd.f32 %v917, %v972
    %974 = vmatmul.bf16.gmra.mxu0 %v932
    %v975 = vpop.f32.mrf.mxu0
    %v976 = vadd.f32 %v917, %v975
    %v977 = vpop.f32.mrf.mxu0
    %v978 = vadd.f32 %v917, %v977
    %979 = vmatmul.bf16.gmra.mxu0 %v935
    %v980 = vpop.f32.mrf.mxu0
    %v981 = vadd.f32 %v917, %v980
    %v982 = vpop.f32.mrf.mxu0
    %v983 = vadd.f32 %v917, %v982
    %984 = vmatmul.bf16.gmra.mxu0 %v938
    %v985 = vpop.f32.mrf.mxu0
    %v986 = vadd.f32 %v917, %v985
    %v987 = vpop.f32.mrf.mxu0
    %v988 = vadd.f32 %v917, %v987
    %989 = vmatmul.bf16.gmra.mxu0 %v941
    %v990 = vpop.f32.mrf.mxu0
    %v991 = vadd.f32 %v917, %v990
    %v992 = vpop.f32.mrf.mxu0
    %v993 = vadd.f32 %v917, %v992
    %994 = vdwg.mxu0
    %v995 = vld [vmem:[#allocation3] sm:$0xf]
    %v996 = vld [vmem:[#allocation3 + $0x4] sm:$0xf]
    %v997 = vld [vmem:[#allocation3 + $0x8] sm:$0xf]
    %v998 = vld [vmem:[#allocation3 + $0xc] sm:$0xf]
    %v999 = vld [vmem:[#allocation3 + $0x10] sm:$0xf]
    %v1000 = vld [vmem:[#allocation3 + $0x14] sm:$0xf]
    %v1001 = vld [vmem:[#allocation3 + $0x18] sm:$0xf]
    %v1002 = vld [vmem:[#allocation3 + $0x1c] sm:$0xf]
    %v1003 = vld [vmem:[#allocation3 + $0x20] sm:$0xf]
    %v1004 = vld [vmem:[#allocation3 + $0x24] sm:$0xf]
    %v1005 = vld [vmem:[#allocation3 + $0x28] sm:$0xf]
    %v1006 = vld [vmem:[#allocation3 + $0x2c] sm:$0xf]
    %v1007 = vld [vmem:[#allocation3 + $0x30] sm:$0xf]
    %v1008 = vld [vmem:[#allocation3 + $0x34] sm:$0xf]
    %v1009 = vld [vmem:[#allocation3 + $0x38] sm:$0xf]
    %v1010 = vld [vmem:[#allocation3 + $0x3c] sm:$0xf]
    %v1011 = vunpack.c.l.bf16 %v995
    %v1012 = vunpack.c.l.bf16 %v996
    %v1013 = vunpack.c.l.bf16 %v997
    %v1014 = vunpack.c.l.bf16 %v998
    %v1015 = vunpack.c.l.bf16 %v999
    %v1016 = vunpack.c.l.bf16 %v1000
    %v1017 = vunpack.c.l.bf16 %v1001
    %v1018 = vunpack.c.l.bf16 %v1002
    %v1019 = vunpack.c.l.bf16 %v1003
    %v1020 = vunpack.c.l.bf16 %v1004
    %v1021 = vunpack.c.l.bf16 %v1005
    %v1022 = vunpack.c.l.bf16 %v1006
    %v1023 = vunpack.c.l.bf16 %v1007
    %v1024 = vunpack.c.l.bf16 %v1008
    %v1025 = vunpack.c.l.bf16 %v1009
    %v1026 = vunpack.c.l.bf16 %v1010
    %v1027 = vadd.f32 %v956, %v1011
    %v1028 = vadd.f32 %v958, %v1012
    %v1029 = vadd.f32 %v961, %v1013
    %v1030 = vadd.f32 %v963, %v1014
    %v1031 = vadd.f32 %v966, %v1015
    %v1032 = vadd.f32 %v968, %v1016
    %v1033 = vadd.f32 %v971, %v1017
    %v1034 = vadd.f32 %v973, %v1018
    %v1035 = vadd.f32 %v976, %v1019
    %v1036 = vadd.f32 %v978, %v1020
    %v1037 = vadd.f32 %v981, %v1021
    %v1038 = vadd.f32 %v983, %v1022
    %v1039 = vadd.f32 %v986, %v1023
    %v1040 = vadd.f32 %v988, %v1024
    %v1041 = vadd.f32 %v991, %v1025
    %v1042 = vadd.f32 %v993, %v1026
    %vm1043 = vcmp.gt.f32.partialorder %v1027, 0.0
    %vm1044 = vcmp.gt.f32.partialorder %v1028, 0.0
    %vm1045 = vcmp.gt.f32.partialorder %v1029, 0.0
    %vm1046 = vcmp.gt.f32.partialorder %v1030, 0.0
    %vm1047 = vcmp.gt.f32.partialorder %v1031, 0.0
    %vm1048 = vcmp.gt.f32.partialorder %v1032, 0.0
    %vm1049 = vcmp.gt.f32.partialorder %v1033, 0.0
    %vm1050 = vcmp.gt.f32.partialorder %v1034, 0.0
    %vm1051 = vcmp.gt.f32.partialorder %v1035, 0.0
    %vm1052 = vcmp.gt.f32.partialorder %v1036, 0.0
    %vm1053 = vcmp.gt.f32.partialorder %v1037, 0.0
    %vm1054 = vcmp.gt.f32.partialorder %v1038, 0.0
    %vm1055 = vcmp.gt.f32.partialorder %v1039, 0.0
    %vm1056 = vcmp.gt.f32.partialorder %v1040, 0.0
    %vm1057 = vcmp.gt.f32.partialorder %v1041, 0.0
    %vm1058 = vcmp.gt.f32.partialorder %v1042, 0.0
    %v1059 = vld [vmem:[%s10] sm:$0x1]
    %v1061 = vperm.slane %v1059, 0
    %v1063 = vmul.f32 %v1061, %v1027
    %v1064 = vmul.f32 %v1061, %v1028
    %v1065 = vmul.f32 %v1061, %v1029
    %v1066 = vmul.f32 %v1061, %v1030
    %v1067 = vmul.f32 %v1061, %v1031
    %v1068 = vmul.f32 %v1061, %v1032
    %v1069 = vmul.f32 %v1061, %v1033
    %v1070 = vmul.f32 %v1061, %v1034
    %v1071 = vmul.f32 %v1061, %v1035
    %v1072 = vmul.f32 %v1061, %v1036
    %v1073 = vmul.f32 %v1061, %v1037
    %v1074 = vmul.f32 %v1061, %v1038
    %v1075 = vmul.f32 %v1061, %v1039
    %v1076 = vmul.f32 %v1061, %v1040
    %v1077 = vmul.f32 %v1061, %v1041
    %v1078 = vmul.f32 %v1061, %v1042
    %v1079 = vsel %vm1043, %v1027, %v1063
    %v1080 = vsel %vm1044, %v1028, %v1064
    %v1081 = vsel %vm1045, %v1029, %v1065
    %v1082 = vsel %vm1046, %v1030, %v1066
    %v1083 = vsel %vm1047, %v1031, %v1067
    %v1084 = vsel %vm1048, %v1032, %v1068
    %v1085 = vsel %vm1049, %v1033, %v1069
    %v1086 = vsel %vm1050, %v1034, %v1070
    %v1087 = vsel %vm1051, %v1035, %v1071
    %v1088 = vsel %vm1052, %v1036, %v1072
    %v1089 = vsel %vm1053, %v1037, %v1073
    %v1090 = vsel %vm1054, %v1038, %v1074
    %v1091 = vsel %vm1055, %v1039, %v1075
    %v1092 = vsel %vm1056, %v1040, %v1076
    %v1093 = vsel %vm1057, %v1041, %v1077
    %v1094 = vsel %vm1058, %v1042, %v1078
    %v1095 = vpack.c.bf16 %v1079, %v1079
    %v1096 = vpack.c.bf16 %v1080, %v1080
    %v1097 = vpack.c.bf16 %v1081, %v1081
    %v1098 = vpack.c.bf16 %v1082, %v1082
    %v1099 = vpack.c.bf16 %v1083, %v1083
    %v1100 = vpack.c.bf16 %v1084, %v1084
    %v1101 = vpack.c.bf16 %v1085, %v1085
    %v1102 = vpack.c.bf16 %v1086, %v1086
    %v1103 = vpack.c.bf16 %v1087, %v1087
    %v1104 = vpack.c.bf16 %v1088, %v1088
    %v1105 = vpack.c.bf16 %v1089, %v1089
    %v1106 = vpack.c.bf16 %v1090, %v1090
    %v1107 = vpack.c.bf16 %v1091, %v1091
    %v1108 = vpack.c.bf16 %v1092, %v1092
    %v1109 = vpack.c.bf16 %v1093, %v1093
    %v1110 = vpack.c.bf16 %v1094, %v1094
    %vm1111 = vcmask 257024
    %1112 = vst.msk [vmem:[#allocation6] sm:$0xf] %vm1111, %v1095
    %1113 = vst.msk [vmem:[#allocation6 + $0x4] sm:$0xf] %vm1111, %v1096
    %1114 = vst.msk [vmem:[#allocation6 + $0x8] sm:$0xf] %vm1111, %v1097
    %1115 = vst.msk [vmem:[#allocation6 + $0xc] sm:$0xf] %vm1111, %v1098
    %1116 = vst.msk [vmem:[#allocation6 + $0x10] sm:$0xf] %vm1111, %v1099
    %1117 = vst.msk [vmem:[#allocation6 + $0x14] sm:$0xf] %vm1111, %v1100
    %1118 = vst.msk [vmem:[#allocation6 + $0x18] sm:$0xf] %vm1111, %v1101
    %1119 = vst.msk [vmem:[#allocation6 + $0x1c] sm:$0xf] %vm1111, %v1102
    %1120 = vst.msk [vmem:[#allocation6 + $0x20] sm:$0xf] %vm1111, %v1103
    %1121 = vst.msk [vmem:[#allocation6 + $0x24] sm:$0xf] %vm1111, %v1104
    %1122 = vst.msk [vmem:[#allocation6 + $0x28] sm:$0xf] %vm1111, %v1105
    %1123 = vst.msk [vmem:[#allocation6 + $0x2c] sm:$0xf] %vm1111, %v1106
    %1124 = vst.msk [vmem:[#allocation6 + $0x30] sm:$0xf] %vm1111, %v1107
    %1125 = vst.msk [vmem:[#allocation6 + $0x34] sm:$0xf] %vm1111, %v1108
    %1126 = vst.msk [vmem:[#allocation6 + $0x38] sm:$0xf] %vm1111, %v1109
    %1127 = vst.msk [vmem:[#allocation6 + $0x3c] sm:$0xf] %vm1111, %v1110
    // Predicated region
    $region50: #{tpu_custom_call.1} parent=1 // pred_check
      _
    $region51: #{tpu_custom_call.1} parent=1 // pred_check_branch
      %1129 = sbr.rel (0) target = $region53
    $region52: #{tpu_custom_call.1} parent=1 // pred_region
      %1131 = vsyncadd [#allocation5], 0
      %s1132 = sshll.u32 [#allocation6], 4
      %s1133 = int_to_ptr.vmem [resolvable:$true] %s1132
      %s1134 = sshll.u32 %s11, 4
      %s1135 = int_to_ptr.hbm [resolvable:$true] %s1134
      %1140 = dma.vmem_to_hbm [thread:$0]  %s1133, 1024, %s1135, [#allocation5], 64, 64, 4
    $region53: #{tpu_custom_call.1} parent=1 // pred_fallthru
      _
    // Predicated region
    $region54: #{tpu_custom_call.1} parent=1 // pred_check
      _
    $region55: #{tpu_custom_call.1} parent=1 // pred_check_branch
      %1142 = sbr.rel (0) target = $region57
    $region56: #{tpu_custom_call.1} parent=1 // pred_region
      %1144 = dma.done [#allocation5], 1024
    $region57: #{tpu_custom_call.1} parent=1 // pred_fallthru
      _
    %1145 = vsyncpa [#allocation4], 1
    %1146 = vsyncpa [#allocation5], 1

</llo_original>
